<compile_context>
chip_gen: v6e
topology: v6e:2x2x1
jax: 0.10.0
libtpu: 0.0.40
codegen_flags: <defaults>
</compile_context>

<pallas_src>
import functools

import jax
import jax.numpy as jnp
from jax import lax
from jax.experimental import pallas as pl
from jax.experimental.pallas import tpu as pltpu


def _round_up(x, m):
    return ((x + m - 1) // m) * m


# ----------------------------- Pallas kernel ------------------------------- #
def _network_head_kernel(
    xi_ref,     # (TB, CHW) f32   raw flattened image rows, view i
    xj_ref,     # (TB, CHW) f32   raw flattened image rows, view j
    wbb_ref,    # (CHW, RP) bf16  backbone weight with GAP folded in (rows / (H*W))
    bbb_ref,    # (1, RP)   f32
    w1_ref,     # (RP, 2RP) bf16  fused [instance | cluster] layer-1 weight
    b1_ref,     # (1, 2RP)  f32
    w2_ref,     # (RP, FP)  bf16  instance projector layer 2 (lane-padded)
    b2_ref,     # (1, FP)   f32   (pad lanes = 0)
    w3_ref,     # (RP, KP)  bf16  cluster projector layer 2 (lane-padded)
    b3_ref,     # (1, KP)   f32   (pad lanes = -1e30 -> exp == 0)
    zi_ref,     # (TB, FP)  f32 out  L2-normalized instance features, view i
    ci_ref,     # (TB, KP)  f32 out  cluster soft assignment, view i
    zj_ref,     # (TB, FP)  f32 out  view j
    cj_ref,     # (TB, KP)  f32 out  view j
):
    f32 = jnp.float32
    bf16 = jnp.bfloat16
    RP = w2_ref.shape[0]

    def head(x_raw):
        # Pool + backbone Linear in one K = C*H*W contraction (pool folded into
        # wbb).  TODO(synk): full ResNet backbone not reproduced (external module).
        x_bf = x_raw.astype(bf16)
        h = jnp.maximum(
            jnp.dot(x_bf, wbb_ref[...], preferred_element_type=f32) + bbb_ref[...],
            0.0)

        # Fused layer 1 of both projectors: one wide MXU matmul.  Each half is
        # lane-padded to RP=128 so these slices are vreg-tile aligned (free).
        t = jnp.maximum(
            jnp.dot(h.astype(bf16), w1_ref[...], preferred_element_type=f32)
            + b1_ref[...],
            0.0)
        t_inst = t[:, :RP].astype(bf16)
        t_clus = t[:, RP:].astype(bf16)

        # instance_projector layer 2, then L2 normalize (dim=1).
        # torch.nn.functional.normalize: x / max(||x||_2, 1e-12)
        z = jnp.dot(t_inst, w2_ref[...], preferred_element_type=f32) + b2_ref[...]
        sumsq = jnp.sum(z * z, axis=1, keepdims=True)
        z = z * lax.rsqrt(jnp.maximum(sumsq, 1e-24))

        # cluster_projector layer 2, then Softmax(dim=1).  Pad lanes carry -1e30
        # bias -> exp == 0.  Exact divide (free here) -> exact row sums.
        logits = jnp.dot(t_clus, w3_ref[...], preferred_element_type=f32) + b3_ref[...]
        m = jnp.max(logits, axis=1, keepdims=True)
        e = jnp.exp(logits - m)
        c = e / jnp.sum(e, axis=1, keepdims=True)
        return z, c

    zi, ci = head(xi_ref[...])
    zi_ref[...] = zi.astype(zi_ref.dtype)
    ci_ref[...] = ci.astype(ci_ref.dtype)

    zj, cj = head(xj_ref[...])
    zj_ref[...] = zj.astype(zj_ref.dtype)
    cj_ref[...] = cj.astype(cj_ref.dtype)


# ------------------------------- wrappers ----------------------------------- #
def _pick_row_block(B, CHW, FP, KP, *, cap=256, vmem_budget=24 << 20):
    """Rows per grid step.

    If the whole batch fits the VMEM budget, use a single full-batch block (no
    pad rows, no out-of-bounds reads).  Otherwise tile in multiples of 16
    (bf16-sublane friendly), preferring an even number of blocks so v7x's two
    TensorCores split the 'parallel' axis evenly.
    """
    # both views double-buffered (f32) + four outputs double-buffered (f32)
    per_row = 2 * 2 * CHW * 4 + 2 * 2 * (FP + KP) * 4
    max_rows = max(16, min(cap, (vmem_budget // max(per_row, 1)) // 16 * 16))
    if B <= max_rows:
        return B
    tb = max_rows
    nb = pl.cdiv(B, tb)
    if nb % 2 == 1:
        tb_alt = max(16, _round_up(pl.cdiv(B, nb + 1), 16))
        if pl.cdiv(B, tb_alt) % 2 == 0 and tb_alt <= max_rows:
            tb = tb_alt
    return tb


def network_forward(x_i, x_j, packed, *, feature_dim, class_num):
    """Mirrors Network.forward(x_i, x_j) with bert=None.

    x_i, x_j: (B, C, H, W) NCHW images.  Returns (z_i, z_j, c_i, c_j).
    """
    B = x_i.shape[0]
    CHW = x_i.shape[1] * x_i.shape[2] * x_i.shape[3]

    # Free contiguous-collapse reshapes; no pooling / concat / cast / pad pass.
    xi = x_i.reshape(B, CHW)
    xj = x_j.reshape(B, CHW)

    RP = packed["w2p"].shape[0]
    FP = packed["w2p"].shape[1]
    KP = packed["w3p"].shape[1]
    assert packed["wbbp"].shape[0] == CHW, "pack_params image shape mismatch"

    TB = _pick_row_block(B, CHW, FP, KP)
    NB = pl.cdiv(B, TB)
    Np = NB * TB

    weights = (packed["wbbp"], packed["bbbp"], packed["w1cat"], packed["b1cat"],
               packed["w2p"], packed["b2p"], packed["w3p"], packed["b3p"])

    in_specs = (
        [pl.BlockSpec((TB, CHW), lambda i: (i, 0)),      # x_i rows
         pl.BlockSpec((TB, CHW), lambda i: (i, 0))]      # x_j rows
        # Grid-invariant weights: constant index_map -> single HBM->VMEM DMA,
        # kept resident across all row blocks (~0.4 MB total).
        + [pl.BlockSpec(w.shape, lambda i: (0, 0)) for w in weights]
    )
    out_specs = (
        pl.BlockSpec((TB, FP), lambda i: (i, 0)),
        pl.BlockSpec((TB, KP), lambda i: (i, 0)),
        pl.BlockSpec((TB, FP), lambda i: (i, 0)),
        pl.BlockSpec((TB, KP), lambda i: (i, 0)),
    )
    out_shape = (
        jax.ShapeDtypeStruct((Np, FP), jnp.float32),
        jax.ShapeDtypeStruct((Np, KP), jnp.float32),
        jax.ShapeDtypeStruct((Np, FP), jnp.float32),
        jax.ShapeDtypeStruct((Np, KP), jnp.float32),
    )

    # Advisory cost hint so XLA schedules the surrounding ops around the call.
    flops_per_row = 2 * CHW * RP + 2 * RP * (2 * RP) + 2 * RP * FP + 2 * RP * KP
    weight_bytes = sum(int(w.size) * w.dtype.itemsize for w in weights)
    cost = pl.CostEstimate(
        flops=int(2 * B * flops_per_row),
        transcendentals=int(2 * B * (KP + 1)),
        bytes_accessed=int(2 * B * CHW * xi.dtype.itemsize
                           + weight_bytes
                           + 2 * B * (FP + KP) * 4),
    )

    z_i, c_i, z_j, c_j = pl.pallas_call(
        _network_head_kernel,
        out_shape=out_shape,
        grid=(NB,),
        in_specs=in_specs,
        out_specs=out_specs,
        compiler_params=pltpu.CompilerParams(
            dimension_semantics=("parallel",),
            vmem_limit_bytes=32 * 1024 * 1024,   # > v5e's 16 MiB default; fits all gens
        ),
        cost_estimate=cost,
    )(xi, xj, *weights)

    return (z_i[:B, :feature_dim], z_j[:B, :feature_dim],
            c_i[:B, :class_num], c_j[:B, :class_num])


# ------------------------------ parameters ---------------------------------- #
def init_params(key, in_ch, rep_dim, feature_dim, class_num):
    """Deterministic init matching the module's layer shapes (weights as (in, out))."""
    ks = jax.random.split(key, 5)

    def lin(k, fan_in, fan_out):
        kw, kb = jax.random.split(k)
        bound = 1.0 / jnp.sqrt(fan_in)
        w = jax.random.uniform(kw, (fan_in, fan_out), jnp.float32, -bound, bound)
        b = jax.random.uniform(kb, (1, fan_out), jnp.float32, -bound, bound)
        return w, b

    wbb, bbb = lin(ks[0], in_ch, rep_dim)          # stand-in backbone tail (GAP->Linear->ReLU)
    w1, b1 = lin(ks[1], rep_dim, rep_dim)          # instance projector L1
    w2, b2 = lin(ks[2], rep_dim, feature_dim)      # instance projector L2
    w1c, b1c = lin(ks[3], rep_dim, rep_dim)        # cluster projector L1
    w3, b3 = lin(ks[4], rep_dim, class_num)        # cluster projector L2
    return dict(wbb=wbb, bbb=bbb, w1=w1, b1=b1, w2=w2, b2=b2,
                w1c=w1c, b1c=b1c, w3=w3, b3=b3)


def pack_params(params, image_shape):
    """Fuse / pad / cast parameters for the kernel layout.

    - Global-average-pool folded into the backbone weight: (C, R) -> (C*H*W, R)
      with rows repeated H*W times and scaled by 1/(H*W).
    - R lane-padded to RP = round_up(R, 128); w1|w1c fused into one (RP, 2*RP)
      weight, each half on its own 128-lane group (aligned in-kernel slices).
    - w2/w3 lane-padded to multiples of 128 (zeros); softmax pad-lane biases are
      -1e30 so padded logits vanish.
    - MXU operands cast to bf16; biases stay f32 (added post-accumulation).
    """
    bf16 = jnp.bfloat16
    C, H, W = image_shape
    HW = H * W
    R = params["w1"].shape[0]
    F = params["w2"].shape[1]
    K = params["w3"].shape[1]
    RP = _round_up(R, 128)
    FP = _round_up(F, 128)
    KP = _round_up(K, 128)

    wbb_exp = jnp.repeat(params["wbb"], HW, axis=0) / float(HW)        # (C*H*W, R)
    wbbp = jnp.zeros((C * HW, RP), jnp.float32).at[:, :R].set(wbb_exp)
    bbbp = jnp.zeros((1, RP), jnp.float32).at[:, :R].set(params["bbb"])

    w1cat = jnp.zeros((RP, 2 * RP), jnp.float32)
    w1cat = w1cat.at[:R, :R].set(params["w1"]).at[:R, RP:RP + R].set(params["w1c"])
    b1cat = jnp.zeros((1, 2 * RP), jnp.float32)
    b1cat = b1cat.at[:, :R].set(params["b1"]).at[:, RP:RP + R].set(params["b1c"])

    w2p = jnp.zeros((RP, FP), jnp.float32).at[:R, :F].set(params["w2"])
    b2p = jnp.zeros((1, FP), jnp.float32).at[:, :F].set(params["b2"])
    w3p = jnp.zeros((RP, KP), jnp.float32).at[:R, :K].set(params["w3"])
    b3p = jnp.full((1, KP), -1e30, jnp.float32).at[:, :K].set(params["b3"])

    return dict(
        wbbp=wbbp.astype(bf16), bbbp=bbbp,
        w1cat=w1cat.astype(bf16), b1cat=b1cat,
        w2p=w2p.astype(bf16), b2p=b2p,
        w3p=w3p.astype(bf16), b3p=b3p,
    )


# ------------------------- pure-JAX reference (f32) -------------------------- #
def _reference_forward(x_i, x_j, params):
    def backbone(x):
        B, C, H, W = x.shape
        pooled = jnp.mean(x.reshape(B, C, H * W), axis=-1)
        return jnp.maximum(pooled @ params["wbb"] + params["bbb"], 0.0)

    def instance(h):
        t = jnp.maximum(h @ params["w1"] + params["b1"], 0.0)
        z = t @ params["w2"] + params["b2"]
        n = jnp.maximum(jnp.linalg.norm(z, axis=1, keepdims=True), 1e-12)
        return z / n

    def cluster(h):
        t = jnp.maximum(h @ params["w1c"] + params["b1c"], 0.0)
        return jax.nn.softmax(t @ params["w3"] + params["b3"], axis=1)

    h_i, h_j = backbone(x_i), backbone(x_j)
    return instance(h_i), instance(h_j), cluster(h_i), cluster(h_j)


if __name__ == "__main__":
    B, C, H, W = 2, 4, 16, 16        # NCHW images
    REP_DIM = 32                     # resnet.rep_dim
    FEATURE_DIM = 16                 # feature_dim
    CLASS_NUM = 8                    # class_num

    key = jax.random.PRNGKey(0)
    kxi, kxj, kp = jax.random.split(key, 3)
    x_i = jax.random.normal(kxi, (B, C, H, W), jnp.float32)
    x_j = jax.random.normal(kxj, (B, C, H, W), jnp.float32)

    params = init_params(kp, C, REP_DIM, FEATURE_DIM, CLASS_NUM)
    packed = pack_params(params, (C, H, W))

    fwd = jax.jit(functools.partial(network_forward, feature_dim=FEATURE_DIM,
                                    class_num=CLASS_NUM))
    z_i, z_j, c_i, c_j = fwd(x_i, x_j, packed)
    jax.block_until_ready((z_i, z_j, c_i, c_j))

    # shape / invariant checks (exact softmax division -> tight row-sum check)
    assert z_i.shape == (B, FEATURE_DIM) and z_j.shape == (B, FEATURE_DIM)
    assert c_i.shape == (B, CLASS_NUM) and c_j.shape == (B, CLASS_NUM)
    assert jnp.allclose(jnp.linalg.norm(z_i, axis=1), 1.0, atol=1e-4)
    assert jnp.allclose(jnp.linalg.norm(z_j, axis=1), 1.0, atol=1e-4)
    assert jnp.allclose(jnp.sum(c_i, axis=1), 1.0, atol=1e-5)
    assert jnp.allclose(jnp.sum(c_j, axis=1), 1.0, atol=1e-5)
    assert bool(jnp.all(c_i >= 0.0)) and bool(jnp.all(c_j >= 0.0))

    # compare against pure-JAX f32 reference (bf16 MXU operands -> loose tol)
    rz_i, rz_j, rc_i, rc_j = _reference_forward(x_i, x_j, params)
    for got, ref in ((z_i, rz_i), (z_j, rz_j), (c_i, rc_i), (c_j, rc_j)):
        assert jnp.allclose(got, ref, atol=3e-2), float(jnp.max(jnp.abs(got - ref)))

    print("KERNEL_OK")
</pallas_src>

<mosaic_0001>
module attributes {stable_mosaic.version = 11 : i64} {
  func.func @_network_head_kernel(%arg0: i32, %arg1: memref<2x1024xf32, #tpu.memory_space<vmem>>, %arg2: memref<2x1024xf32, #tpu.memory_space<vmem>>, %arg3: memref<1024x128xbf16, #tpu.memory_space<vmem>>, %arg4: memref<1x128xf32, #tpu.memory_space<vmem>>, %arg5: memref<128x256xbf16, #tpu.memory_space<vmem>>, %arg6: memref<1x256xf32, #tpu.memory_space<vmem>>, %arg7: memref<128x128xbf16, #tpu.memory_space<vmem>>, %arg8: memref<1x128xf32, #tpu.memory_space<vmem>>, %arg9: memref<128x128xbf16, #tpu.memory_space<vmem>>, %arg10: memref<1x128xf32, #tpu.memory_space<vmem>>, %arg11: memref<2x128xf32, #tpu.memory_space<vmem>>, %arg12: memref<2x128xf32, #tpu.memory_space<vmem>>, %arg13: memref<2x128xf32, #tpu.memory_space<vmem>>, %arg14: memref<2x128xf32, #tpu.memory_space<vmem>>) attributes {dimension_semantics = [#tpu.dimension_semantics<parallel>], iteration_bounds = array<i64: 1>, scalar_prefetch = 0 : i64, scratch_operands = 0 : i64, tpu.core_type = #tpu.core_type<tc>, window_params = [{transform_indices = @transform_0, window_bounds = array<i64: 2, 1024>}, {transform_indices = @transform_1, window_bounds = array<i64: 2, 1024>}, {pipeline_mode = #tpu.pipeline_mode<synchronous>, transform_indices = @transform_2, window_bounds = array<i64: 1024, 128>}, {pipeline_mode = #tpu.pipeline_mode<synchronous>, transform_indices = @transform_3, window_bounds = array<i64: 1, 128>}, {pipeline_mode = #tpu.pipeline_mode<synchronous>, transform_indices = @transform_4, window_bounds = array<i64: 128, 256>}, {pipeline_mode = #tpu.pipeline_mode<synchronous>, transform_indices = @transform_5, window_bounds = array<i64: 1, 256>}, {pipeline_mode = #tpu.pipeline_mode<synchronous>, transform_indices = @transform_6, window_bounds = array<i64: 128, 128>}, {pipeline_mode = #tpu.pipeline_mode<synchronous>, transform_indices = @transform_7, window_bounds = array<i64: 1, 128>}, {pipeline_mode = #tpu.pipeline_mode<synchronous>, transform_indices = @transform_8, window_bounds = array<i64: 128, 128>}, {pipeline_mode = #tpu.pipeline_mode<synchronous>, transform_indices = @transform_9, window_bounds = array<i64: 1, 128>}, {transform_indices = @transform_10, window_bounds = array<i64: 2, 128>}, {transform_indices = @transform_11, window_bounds = array<i64: 2, 128>}, {transform_indices = @transform_12, window_bounds = array<i64: 2, 128>}, {transform_indices = @transform_13, window_bounds = array<i64: 2, 128>}]} {
    %c0 = arith.constant 0 : index
    %c0_0 = arith.constant 0 : index
    %0 = vector.load %arg1[%c0, %c0_0] : memref<2x1024xf32, #tpu.memory_space<vmem>>, vector<2x1024xf32>
    %1 = arith.truncf %0 : vector<2x1024xf32> to vector<2x1024xbf16>
    %c0_1 = arith.constant 0 : index
    %c0_2 = arith.constant 0 : index
    %2 = vector.load %arg3[%c0_1, %c0_2] : memref<1024x128xbf16, #tpu.memory_space<vmem>>, vector<1024x128xbf16>
    %cst = arith.constant dense<0.000000e+00> : vector<2x128xf32>
    %3 = tpu.matmul %1, %2, %cst {dimension_numbers = #tpu.dot_dimension_numbers<[1], [0], [0], [1], [0, 0, 1, 1], [], []>} : vector<2x1024xbf16>, vector<1024x128xbf16>, vector<2x128xf32> -> vector<2x128xf32>
    %c0_3 = arith.constant 0 : index
    %c0_4 = arith.constant 0 : index
    %4 = vector.load %arg4[%c0_3, %c0_4] : memref<1x128xf32, #tpu.memory_space<vmem>>, vector<1x128xf32>
    %5 = vector.broadcast %4 : vector<1x128xf32> to vector<2x128xf32>
    %6 = arith.addf %3, %5 : vector<2x128xf32>
    %cst_5 = arith.constant 0.000000e+00 : f32
    %7 = vector.broadcast %cst_5 : f32 to vector<2x128xf32>
    %8 = arith.maximumf %6, %7 : vector<2x128xf32>
    %9 = arith.truncf %8 : vector<2x128xf32> to vector<2x128xbf16>
    %c0_6 = arith.constant 0 : index
    %c0_7 = arith.constant 0 : index
    %10 = vector.load %arg5[%c0_6, %c0_7] : memref<128x256xbf16, #tpu.memory_space<vmem>>, vector<128x256xbf16>
    %cst_8 = arith.constant dense<0.000000e+00> : vector<2x256xf32>
    %11 = tpu.matmul %9, %10, %cst_8 {dimension_numbers = #tpu.dot_dimension_numbers<[1], [0], [0], [1], [0, 0, 1, 1], [], []>} : vector<2x128xbf16>, vector<128x256xbf16>, vector<2x256xf32> -> vector<2x256xf32>
    %c0_9 = arith.constant 0 : index
    %c0_10 = arith.constant 0 : index
    %12 = vector.load %arg6[%c0_9, %c0_10] : memref<1x256xf32, #tpu.memory_space<vmem>>, vector<1x256xf32>
    %13 = vector.broadcast %12 : vector<1x256xf32> to vector<2x256xf32>
    %14 = arith.addf %11, %13 : vector<2x256xf32>
    %cst_11 = arith.constant 0.000000e+00 : f32
    %15 = vector.broadcast %cst_11 : f32 to vector<2x256xf32>
    %16 = arith.maximumf %14, %15 : vector<2x256xf32>
    %17 = vector.extract_strided_slice %16 {offsets = [0, 0], sizes = [2, 128], strides = [1, 1]} : vector<2x256xf32> to vector<2x128xf32>
    %18 = arith.truncf %17 : vector<2x128xf32> to vector<2x128xbf16>
    %19 = vector.extract_strided_slice %16 {offsets = [0, 128], sizes = [2, 128], strides = [1, 1]} : vector<2x256xf32> to vector<2x128xf32>
    %20 = arith.truncf %19 : vector<2x128xf32> to vector<2x128xbf16>
    %c0_12 = arith.constant 0 : index
    %c0_13 = arith.constant 0 : index
    %21 = vector.load %arg7[%c0_12, %c0_13] : memref<128x128xbf16, #tpu.memory_space<vmem>>, vector<128x128xbf16>
    %cst_14 = arith.constant dense<0.000000e+00> : vector<2x128xf32>
    %22 = tpu.matmul %18, %21, %cst_14 {dimension_numbers = #tpu.dot_dimension_numbers<[1], [0], [0], [1], [0, 0, 1, 1], [], []>} : vector<2x128xbf16>, vector<128x128xbf16>, vector<2x128xf32> -> vector<2x128xf32>
    %c0_15 = arith.constant 0 : index
    %c0_16 = arith.constant 0 : index
    %23 = vector.load %arg8[%c0_15, %c0_16] : memref<1x128xf32, #tpu.memory_space<vmem>>, vector<1x128xf32>
    %24 = vector.broadcast %23 : vector<1x128xf32> to vector<2x128xf32>
    %25 = arith.addf %22, %24 : vector<2x128xf32>
    %26 = arith.mulf %25, %25 : vector<2x128xf32>
    %cst_17 = arith.constant dense<0.000000e+00> : vector<2xf32>
    %27 = vector.multi_reduction <add>, %26, %cst_17 [1] : vector<2x128xf32> to vector<2xf32>
    %28 = vector.shape_cast %27 : vector<2xf32> to vector<2x1xf32>
    %cst_18 = arith.constant 1.000000e-24 : f32
    %29 = vector.broadcast %cst_18 : f32 to vector<2x1xf32>
    %30 = arith.maximumf %28, %29 : vector<2x1xf32>
    %31 = math.rsqrt %30 : vector<2x1xf32>
    %32 = vector.broadcast %31 : vector<2x1xf32> to vector<2x128xf32>
    %33 = arith.mulf %25, %32 : vector<2x128xf32>
    %c0_19 = arith.constant 0 : index
    %c0_20 = arith.constant 0 : index
    %34 = vector.load %arg9[%c0_19, %c0_20] : memref<128x128xbf16, #tpu.memory_space<vmem>>, vector<128x128xbf16>
    %cst_21 = arith.constant dense<0.000000e+00> : vector<2x128xf32>
    %35 = tpu.matmul %20, %34, %cst_21 {dimension_numbers = #tpu.dot_dimension_numbers<[1], [0], [0], [1], [0, 0, 1, 1], [], []>} : vector<2x128xbf16>, vector<128x128xbf16>, vector<2x128xf32> -> vector<2x128xf32>
    %c0_22 = arith.constant 0 : index
    %c0_23 = arith.constant 0 : index
    %36 = vector.load %arg10[%c0_22, %c0_23] : memref<1x128xf32, #tpu.memory_space<vmem>>, vector<1x128xf32>
    %37 = vector.broadcast %36 : vector<1x128xf32> to vector<2x128xf32>
    %38 = arith.addf %35, %37 : vector<2x128xf32>
    %cst_24 = arith.constant dense<0xFF800000> : vector<2xf32>
    %39 = vector.multi_reduction <maximumf>, %38, %cst_24 [1] : vector<2x128xf32> to vector<2xf32>
    %40 = vector.shape_cast %39 : vector<2xf32> to vector<2x1xf32>
    %41 = vector.broadcast %40 : vector<2x1xf32> to vector<2x128xf32>
    %42 = arith.subf %38, %41 : vector<2x128xf32>
    %43 = math.exp %42 : vector<2x128xf32>
    %cst_25 = arith.constant dense<0.000000e+00> : vector<2xf32>
    %44 = vector.multi_reduction <add>, %43, %cst_25 [1] : vector<2x128xf32> to vector<2xf32>
    %45 = vector.shape_cast %44 : vector<2xf32> to vector<2x1xf32>
    %46 = vector.broadcast %45 : vector<2x1xf32> to vector<2x128xf32>
    %47 = arith.divf %43, %46 : vector<2x128xf32>
    %c0_26 = arith.constant 0 : index
    %c0_27 = arith.constant 0 : index
    %48 = vector.load %arg11[%c0_26, %c0_27] : memref<2x128xf32, #tpu.memory_space<vmem>>, vector<2x128xf32>
    tpu.vector_store %arg11[%c0_26, %c0_27], %33 {strides = array<i32>} : memref<2x128xf32, #tpu.memory_space<vmem>>, vector<2x128xf32>,
    %c0_28 = arith.constant 0 : index
    %c0_29 = arith.constant 0 : index
    %49 = vector.load %arg12[%c0_28, %c0_29] : memref<2x128xf32, #tpu.memory_space<vmem>>, vector<2x128xf32>
    tpu.vector_store %arg12[%c0_28, %c0_29], %47 {strides = array<i32>} : memref<2x128xf32, #tpu.memory_space<vmem>>, vector<2x128xf32>,
    %c0_30 = arith.constant 0 : index
    %c0_31 = arith.constant 0 : index
    %50 = vector.load %arg2[%c0_30, %c0_31] : memref<2x1024xf32, #tpu.memory_space<vmem>>, vector<2x1024xf32>
    %51 = arith.truncf %50 : vector<2x1024xf32> to vector<2x1024xbf16>
    %c0_32 = arith.constant 0 : index
    %c0_33 = arith.constant 0 : index
    %52 = vector.load %arg3[%c0_32, %c0_33] : memref<1024x128xbf16, #tpu.memory_space<vmem>>, vector<1024x128xbf16>
    %cst_34 = arith.constant dense<0.000000e+00> : vector<2x128xf32>
    %53 = tpu.matmul %51, %52, %cst_34 {dimension_numbers = #tpu.dot_dimension_numbers<[1], [0], [0], [1], [0, 0, 1, 1], [], []>} : vector<2x1024xbf16>, vector<1024x128xbf16>, vector<2x128xf32> -> vector<2x128xf32>
    %c0_35 = arith.constant 0 : index
    %c0_36 = arith.constant 0 : index
    %54 = vector.load %arg4[%c0_35, %c0_36] : memref<1x128xf32, #tpu.memory_space<vmem>>, vector<1x128xf32>
    %55 = vector.broadcast %54 : vector<1x128xf32> to vector<2x128xf32>
    %56 = arith.addf %53, %55 : vector<2x128xf32>
    %cst_37 = arith.constant 0.000000e+00 : f32
    %57 = vector.broadcast %cst_37 : f32 to vector<2x128xf32>
    %58 = arith.maximumf %56, %57 : vector<2x128xf32>
    %59 = arith.truncf %58 : vector<2x128xf32> to vector<2x128xbf16>
    %c0_38 = arith.constant 0 : index
    %c0_39 = arith.constant 0 : index
    %60 = vector.load %arg5[%c0_38, %c0_39] : memref<128x256xbf16, #tpu.memory_space<vmem>>, vector<128x256xbf16>
    %cst_40 = arith.constant dense<0.000000e+00> : vector<2x256xf32>
    %61 = tpu.matmul %59, %60, %cst_40 {dimension_numbers = #tpu.dot_dimension_numbers<[1], [0], [0], [1], [0, 0, 1, 1], [], []>} : vector<2x128xbf16>, vector<128x256xbf16>, vector<2x256xf32> -> vector<2x256xf32>
    %c0_41 = arith.constant 0 : index
    %c0_42 = arith.constant 0 : index
    %62 = vector.load %arg6[%c0_41, %c0_42] : memref<1x256xf32, #tpu.memory_space<vmem>>, vector<1x256xf32>
    %63 = vector.broadcast %62 : vector<1x256xf32> to vector<2x256xf32>
    %64 = arith.addf %61, %63 : vector<2x256xf32>
    %cst_43 = arith.constant 0.000000e+00 : f32
    %65 = vector.broadcast %cst_43 : f32 to vector<2x256xf32>
    %66 = arith.maximumf %64, %65 : vector<2x256xf32>
    %67 = vector.extract_strided_slice %66 {offsets = [0, 0], sizes = [2, 128], strides = [1, 1]} : vector<2x256xf32> to vector<2x128xf32>
    %68 = arith.truncf %67 : vector<2x128xf32> to vector<2x128xbf16>
    %69 = vector.extract_strided_slice %66 {offsets = [0, 128], sizes = [2, 128], strides = [1, 1]} : vector<2x256xf32> to vector<2x128xf32>
    %70 = arith.truncf %69 : vector<2x128xf32> to vector<2x128xbf16>
    %c0_44 = arith.constant 0 : index
    %c0_45 = arith.constant 0 : index
    %71 = vector.load %arg7[%c0_44, %c0_45] : memref<128x128xbf16, #tpu.memory_space<vmem>>, vector<128x128xbf16>
    %cst_46 = arith.constant dense<0.000000e+00> : vector<2x128xf32>
    %72 = tpu.matmul %68, %71, %cst_46 {dimension_numbers = #tpu.dot_dimension_numbers<[1], [0], [0], [1], [0, 0, 1, 1], [], []>} : vector<2x128xbf16>, vector<128x128xbf16>, vector<2x128xf32> -> vector<2x128xf32>
    %c0_47 = arith.constant 0 : index
    %c0_48 = arith.constant 0 : index
    %73 = vector.load %arg8[%c0_47, %c0_48] : memref<1x128xf32, #tpu.memory_space<vmem>>, vector<1x128xf32>
    %74 = vector.broadcast %73 : vector<1x128xf32> to vector<2x128xf32>
    %75 = arith.addf %72, %74 : vector<2x128xf32>
    %76 = arith.mulf %75, %75 : vector<2x128xf32>
    %cst_49 = arith.constant dense<0.000000e+00> : vector<2xf32>
    %77 = vector.multi_reduction <add>, %76, %cst_49 [1] : vector<2x128xf32> to vector<2xf32>
    %78 = vector.shape_cast %77 : vector<2xf32> to vector<2x1xf32>
    %cst_50 = arith.constant 1.000000e-24 : f32
    %79 = vector.broadcast %cst_50 : f32 to vector<2x1xf32>
    %80 = arith.maximumf %78, %79 : vector<2x1xf32>
    %81 = math.rsqrt %80 : vector<2x1xf32>
    %82 = vector.broadcast %81 : vector<2x1xf32> to vector<2x128xf32>
    %83 = arith.mulf %75, %82 : vector<2x128xf32>
    %c0_51 = arith.constant 0 : index
    %c0_52 = arith.constant 0 : index
    %84 = vector.load %arg9[%c0_51, %c0_52] : memref<128x128xbf16, #tpu.memory_space<vmem>>, vector<128x128xbf16>
    %cst_53 = arith.constant dense<0.000000e+00> : vector<2x128xf32>
    %85 = tpu.matmul %70, %84, %cst_53 {dimension_numbers = #tpu.dot_dimension_numbers<[1], [0], [0], [1], [0, 0, 1, 1], [], []>} : vector<2x128xbf16>, vector<128x128xbf16>, vector<2x128xf32> -> vector<2x128xf32>
    %c0_54 = arith.constant 0 : index
    %c0_55 = arith.constant 0 : index
    %86 = vector.load %arg10[%c0_54, %c0_55] : memref<1x128xf32, #tpu.memory_space<vmem>>, vector<1x128xf32>
    %87 = vector.broadcast %86 : vector<1x128xf32> to vector<2x128xf32>
    %88 = arith.addf %85, %87 : vector<2x128xf32>
    %cst_56 = arith.constant dense<0xFF800000> : vector<2xf32>
    %89 = vector.multi_reduction <maximumf>, %88, %cst_56 [1] : vector<2x128xf32> to vector<2xf32>
    %90 = vector.shape_cast %89 : vector<2xf32> to vector<2x1xf32>
    %91 = vector.broadcast %90 : vector<2x1xf32> to vector<2x128xf32>
    %92 = arith.subf %88, %91 : vector<2x128xf32>
    %93 = math.exp %92 : vector<2x128xf32>
    %cst_57 = arith.constant dense<0.000000e+00> : vector<2xf32>
    %94 = vector.multi_reduction <add>, %93, %cst_57 [1] : vector<2x128xf32> to vector<2xf32>
    %95 = vector.shape_cast %94 : vector<2xf32> to vector<2x1xf32>
    %96 = vector.broadcast %95 : vector<2x1xf32> to vector<2x128xf32>
    %97 = arith.divf %93, %96 : vector<2x128xf32>
    %c0_58 = arith.constant 0 : index
    %c0_59 = arith.constant 0 : index
    %98 = vector.load %arg13[%c0_58, %c0_59] : memref<2x128xf32, #tpu.memory_space<vmem>>, vector<2x128xf32>
    tpu.vector_store %arg13[%c0_58, %c0_59], %83 {strides = array<i32>} : memref<2x128xf32, #tpu.memory_space<vmem>>, vector<2x128xf32>,
    %c0_60 = arith.constant 0 : index
    %c0_61 = arith.constant 0 : index
    %99 = vector.load %arg14[%c0_60, %c0_61] : memref<2x128xf32, #tpu.memory_space<vmem>>, vector<2x128xf32>
    tpu.vector_store %arg14[%c0_60, %c0_61], %97 {strides = array<i32>} : memref<2x128xf32, #tpu.memory_space<vmem>>, vector<2x128xf32>,
    return
  }
  func.func @transform_0(%arg0: i32) -> (i32, i32) {
    %c0_i32 = arith.constant 0 : i32
    %c0_i32_0 = arith.constant 0 : i32
    return %arg0, %c0_i32 : i32, i32
  }
  func.func @transform_1(%arg0: i32) -> (i32, i32) {
    %c0_i32 = arith.constant 0 : i32
    %c0_i32_0 = arith.constant 0 : i32
    return %arg0, %c0_i32 : i32, i32
  }
  func.func @transform_2(%arg0: i32) -> (i32, i32) {
    %c0_i32 = arith.constant 0 : i32
    %c0_i32_0 = arith.constant 0 : i32
    %c0_i32_1 = arith.constant 0 : i32
    return %c0_i32, %c0_i32_0 : i32, i32
  }
  func.func @transform_3(%arg0: i32) -> (i32, i32) {
    %c0_i32 = arith.constant 0 : i32
    %c0_i32_0 = arith.constant 0 : i32
    %c0_i32_1 = arith.constant 0 : i32
    return %c0_i32, %c0_i32_0 : i32, i32
  }
  func.func @transform_4(%arg0: i32) -> (i32, i32) {
    %c0_i32 = arith.constant 0 : i32
    %c0_i32_0 = arith.constant 0 : i32
    %c0_i32_1 = arith.constant 0 : i32
    return %c0_i32, %c0_i32_0 : i32, i32
  }
  func.func @transform_5(%arg0: i32) -> (i32, i32) {
    %c0_i32 = arith.constant 0 : i32
    %c0_i32_0 = arith.constant 0 : i32
    %c0_i32_1 = arith.constant 0 : i32
    return %c0_i32, %c0_i32_0 : i32, i32
  }
  func.func @transform_6(%arg0: i32) -> (i32, i32) {
    %c0_i32 = arith.constant 0 : i32
    %c0_i32_0 = arith.constant 0 : i32
    %c0_i32_1 = arith.constant 0 : i32
    return %c0_i32, %c0_i32_0 : i32, i32
  }
  func.func @transform_7(%arg0: i32) -> (i32, i32) {
    %c0_i32 = arith.constant 0 : i32
    %c0_i32_0 = arith.constant 0 : i32
    %c0_i32_1 = arith.constant 0 : i32
    return %c0_i32, %c0_i32_0 : i32, i32
  }
  func.func @transform_8(%arg0: i32) -> (i32, i32) {
    %c0_i32 = arith.constant 0 : i32
    %c0_i32_0 = arith.constant 0 : i32
    %c0_i32_1 = arith.constant 0 : i32
    return %c0_i32, %c0_i32_0 : i32, i32
  }
  func.func @transform_9(%arg0: i32) -> (i32, i32) {
    %c0_i32 = arith.constant 0 : i32
    %c0_i32_0 = arith.constant 0 : i32
    %c0_i32_1 = arith.constant 0 : i32
    return %c0_i32, %c0_i32_0 : i32, i32
  }
  func.func @transform_10(%arg0: i32) -> (i32, i32) {
    %c0_i32 = arith.constant 0 : i32
    %c0_i32_0 = arith.constant 0 : i32
    return %arg0, %c0_i32 : i32, i32
  }
  func.func @transform_11(%arg0: i32) -> (i32, i32) {
    %c0_i32 = arith.constant 0 : i32
    %c0_i32_0 = arith.constant 0 : i32
    return %arg0, %c0_i32 : i32, i32
  }
  func.func @transform_12(%arg0: i32) -> (i32, i32) {
    %c0_i32 = arith.constant 0 : i32
    %c0_i32_0 = arith.constant 0 : i32
    return %arg0, %c0_i32 : i32, i32
  }
  func.func @transform_13(%arg0: i32) -> (i32, i32) {
    %c0_i32 = arith.constant 0 : i32
    %c0_i32_0 = arith.constant 0 : i32
    return %arg0, %c0_i32 : i32, i32
  }
}

</mosaic_0001>

<llo_original>
// kernel: network_forward.1
$region0: #{network_forward.1}
  #allocation0 [shape = 'u32[]', space=smem, size = 0x4, offset = 0x4, fixed_abs, tag = 'smem constant byte address 0x4 - core index']
  #allocation1 [shape = 'u32[144,128]{1,0:T(1,128)}', space=vmem, size = 0x12000, scoped, tag = 'internal scratch']
  %s0 = inlined_call_operand.vmem [shape: f32[2,1024], index: 0, kind: input, shape index: {}]
  %s1 = inlined_call_operand.vmem [shape: f32[2,1024], index: 1, kind: input, shape index: {}]
  %s2 = inlined_call_operand.hbm [shape: bf16[1024,128], index: 2, kind: input, shape index: {}]
  %s3 = inlined_call_operand.vmem [shape: f32[1,128], index: 3, kind: input, shape index: {}]
  %s4 = inlined_call_operand.vmem [shape: bf16[128,256], index: 4, kind: input, shape index: {}]
  %s5 = inlined_call_operand.vmem [shape: f32[1,256], index: 5, kind: input, shape index: {}]
  %s6 = inlined_call_operand.hbm [shape: bf16[128,128], index: 6, kind: input, shape index: {}]
  %s7 = inlined_call_operand.vmem [shape: f32[1,128], index: 7, kind: input, shape index: {}]
  %s8 = inlined_call_operand.hbm [shape: bf16[128,128], index: 8, kind: input, shape index: {}]
  %s9 = inlined_call_operand.vmem [shape: f32[1,128], index: 9, kind: input, shape index: {}]
  %s10 = inlined_call_operand.hbm [shape: f32[2,128], index: 10, kind: output, shape index: {0}]
  %s11 = inlined_call_operand.hbm [shape: f32[2,128], index: 11, kind: output, shape index: {1}]
  %s12 = inlined_call_operand.hbm [shape: f32[2,128], index: 12, kind: output, shape index: {2}]
  %s13 = inlined_call_operand.hbm [shape: f32[2,128], index: 13, kind: output, shape index: {3}]
  %14 = xla_tuple %s10, %s11, %s12, %s13
  %s15 = sld [smem:[#allocation0]]
  $region86: #{network_forward.1} parent=0
    _
  %s17 = ssub.s32 1, %s15
  %s18 = scalar_select 0, %s17, %s15
  $region1: #{network_forward.1} parent=0
    #allocation2 [shape = 'u8[262144]{0}', space=vmem, size = 0x40000, scoped, tag = 'input window, operand 2, single buffered']
    #allocation3 [shape = 's32[1]{0}', space=sflag, size = 0x4, scoped, tag = 'scoped memory for network_forward.1']
    #allocation4 [shape = 's32[1]{0}', space=sflag, size = 0x4, scoped, tag = 'scoped memory for network_forward.1']
    #allocation5 [shape = 'u8[32768]{0}', space=vmem, size = 0x8000, scoped, tag = 'input window, operand 6, single buffered']
    #allocation6 [shape = 's32[1]{0}', space=sflag, size = 0x4, scoped, tag = 'scoped memory for network_forward.1']
    #allocation7 [shape = 'u8[32768]{0}', space=vmem, size = 0x8000, scoped, tag = 'input window, operand 8, single buffered']
    #allocation8 [shape = 'u8[1024]{0}', space=vmem, size = 0x400, scoped, tag = 'output window, operand 0, single buffered']
    #allocation9 [shape = 'u8[1024]{0}', space=vmem, size = 0x400, scoped, tag = 'output window, operand 1, single buffered']
    #allocation10 [shape = 's32[1]{0}', space=sflag, size = 0x4, scoped, tag = 'scoped memory for network_forward.1']
    #allocation11 [shape = 'u8[1024]{0}', space=vmem, size = 0x400, scoped, tag = 'output window, operand 2, single buffered']
    #allocation12 [shape = 'u8[1024]{0}', space=vmem, size = 0x400, scoped, tag = 'output window, operand 3, single buffered']
    #allocation13 [shape = 's32[1]{0}', space=sflag, size = 0x4, scoped, tag = 'scoped memory for network_forward.1']
    %19 = vsyncpa [#allocation3], 0
    %20 = vsyncpa [#allocation6], 0
    %21 = vsyncpa [#allocation4], 0
    %22 = vsyncpa [#allocation10], 0
    %23 = vsyncpa [#allocation13], 0
    // Predicated region
    $region2: #{network_forward.1} parent=1 // pred_check
      _
    $region3: #{network_forward.1} parent=1 // pred_check_branch
      %25 = sbr.rel (0) target = $region5
    $region4: #{network_forward.1} parent=1 // pred_region
      _
    $region5: #{network_forward.1} parent=1 // pred_fallthru
      _
    // Predicated region
    $region6: #{network_forward.1} parent=1 // pred_check
      _
    $region7: #{network_forward.1} parent=1 // pred_check_branch
      %27 = sbr.rel (0) target = $region9
    $region8: #{network_forward.1} parent=1 // pred_region
      _
    $region9: #{network_forward.1} parent=1 // pred_fallthru
      _
    // Predicated region
    $region10: #{network_forward.1} parent=1 // pred_check
      _
    $region11: #{network_forward.1} parent=1 // pred_check_branch
      %29 = sbr.rel (0) target = $region13
    $region12: #{network_forward.1} parent=1 // pred_region
      %s31 = ssub.s32 8192, 8192
      %32 = vsyncadd [#allocation3], %s31
      %s33 = sshll.u32 [#allocation2], 4
      %s34 = int_to_ptr.vmem [resolvable:$true] %s33
      %39 = dma.hbm_to_vmem [thread:$0]  %s2, 8192, %s34, [#allocation3], 64, 64, 4
    $region13: #{network_forward.1} parent=1 // pred_fallthru
      _
    // Predicated region
    $region14: #{network_forward.1} parent=1 // pred_check
      _
    $region15: #{network_forward.1} parent=1 // pred_check_branch
      %41 = sbr.rel (0) target = $region17
    $region16: #{network_forward.1} parent=1 // pred_region
      _
    $region17: #{network_forward.1} parent=1 // pred_fallthru
      _
    // Predicated region
    $region18: #{network_forward.1} parent=1 // pred_check
      _
    $region19: #{network_forward.1} parent=1 // pred_check_branch
      %43 = sbr.rel (0) target = $region21
    $region20: #{network_forward.1} parent=1 // pred_region
      _
    $region21: #{network_forward.1} parent=1 // pred_fallthru
      _
    // Predicated region
    $region22: #{network_forward.1} parent=1 // pred_check
      _
    $region23: #{network_forward.1} parent=1 // pred_check_branch
      %45 = sbr.rel (0) target = $region25
    $region24: #{network_forward.1} parent=1 // pred_region
      _
    $region25: #{network_forward.1} parent=1 // pred_fallthru
      _
    // Predicated region
    $region26: #{network_forward.1} parent=1 // pred_check
      _
    $region27: #{network_forward.1} parent=1 // pred_check_branch
      %47 = sbr.rel (0) target = $region29
    $region28: #{network_forward.1} parent=1 // pred_region
      %s49 = ssub.s32 1024, 1024
      %50 = vsyncadd [#allocation6], %s49
      %s51 = sshll.u32 [#allocation5], 4
      %s52 = int_to_ptr.vmem [resolvable:$true] %s51
      %57 = dma.hbm_to_vmem [thread:$0]  %s6, 1024, %s52, [#allocation6], 64, 64, 4
    $region29: #{network_forward.1} parent=1 // pred_fallthru
      _
    // Predicated region
    $region30: #{network_forward.1} parent=1 // pred_check
      _
    $region31: #{network_forward.1} parent=1 // pred_check_branch
      %59 = sbr.rel (0) target = $region33
    $region32: #{network_forward.1} parent=1 // pred_region
      _
    $region33: #{network_forward.1} parent=1 // pred_fallthru
      _
    // Predicated region
    $region34: #{network_forward.1} parent=1 // pred_check
      _
    $region35: #{network_forward.1} parent=1 // pred_check_branch
      %61 = sbr.rel (0) target = $region37
    $region36: #{network_forward.1} parent=1 // pred_region
      %s63 = ssub.s32 1024, 1024
      %64 = vsyncadd [#allocation6], %s63
      %s65 = sshll.u32 [#allocation7], 4
      %s66 = int_to_ptr.vmem [resolvable:$true] %s65
      %71 = dma.hbm_to_vmem [thread:$0]  %s8, 1024, %s66, [#allocation6], 64, 64, 4
    $region37: #{network_forward.1} parent=1 // pred_fallthru
      _
    // Predicated region
    $region38: #{network_forward.1} parent=1 // pred_check
      _
    $region39: #{network_forward.1} parent=1 // pred_check_branch
      %73 = sbr.rel (0) target = $region41
    $region40: #{network_forward.1} parent=1 // pred_region
      _
    $region41: #{network_forward.1} parent=1 // pred_fallthru
      _
    // Predicated region
    $region42: #{network_forward.1} parent=1 // pred_check
      _
    $region43: #{network_forward.1} parent=1 // pred_check_branch
      %75 = sbr.rel (0) target = $region45
    $region44: #{network_forward.1} parent=1 // pred_region
      %76 = dma.done [#allocation3], 8192
    $region45: #{network_forward.1} parent=1 // pred_fallthru
      _
    // Predicated region
    $region46: #{network_forward.1} parent=1 // pred_check
      _
    $region47: #{network_forward.1} parent=1 // pred_check_branch
      %78 = sbr.rel (0) target = $region49
    $region48: #{network_forward.1} parent=1 // pred_region
      %79 = dma.done [#allocation6], 1024
    $region49: #{network_forward.1} parent=1 // pred_fallthru
      _
    // Predicated region
    $region50: #{network_forward.1} parent=1 // pred_check
      _
    $region51: #{network_forward.1} parent=1 // pred_check_branch
      %81 = sbr.rel (0) target = $region53
    $region52: #{network_forward.1} parent=1 // pred_region
      %82 = dma.done [#allocation6], 1024
    $region53: #{network_forward.1} parent=1 // pred_fallthru
      _
    %v84 = vld [vmem:[%s0] sm:$0xff]
    %v85 = vld [vmem:[%s0 + $0x8] sm:$0xff]
    %v88 = vcombine.high %v84, %v84
    %v90 = vunpack.c.l.s4 1983009808
    %v91 = vunpack.c.0.s8 %v90
    %v92 = vlaneseq
    %v93 = vshrl.u32 %v92, 7
    %v94 = vsub.s32 %v91, %v93
    %v95 = vrot.slane %v84, %v94
    %v97 = vunpack.c.l.s4 1983009808
    %v98 = vunpack.c.0.s8 %v97
    %v99 = vlaneseq
    %v100 = vshrl.u32 %v99, 7
    %v101 = vsub.s32 %v98, %v100
    %v102 = vrot.slane %v88, %v101
    %v103 = vcombine.high %v95, %v95
    %v104 = vcombine.high %v102, %v102
    %v105 = vcombine.high %v85, %v85
    %v107 = vunpack.c.l.s4 1983009808
    %v108 = vunpack.c.0.s8 %v107
    %v109 = vlaneseq
    %v110 = vshrl.u32 %v109, 7
    %v111 = vsub.s32 %v108, %v110
    %v112 = vrot.slane %v85, %v111
    %v114 = vunpack.c.l.s4 1983009808
    %v115 = vunpack.c.0.s8 %v114
    %v116 = vlaneseq
    %v117 = vshrl.u32 %v116, 7
    %v118 = vsub.s32 %v115, %v117
    %v119 = vrot.slane %v105, %v118
    %v120 = vcombine.high %v112, %v112
    %v121 = vcombine.high %v119, %v119
    %v130 = vpack.c.bf16 %v95, %v95
    %v131 = vpack.c.bf16 %v103, %v103
    %v132 = vpack.c.bf16 %v102, %v102
    %v133 = vpack.c.bf16 %v104, %v104
    %v134 = vpack.c.bf16 %v112, %v112
    %v135 = vpack.c.bf16 %v120, %v120
    %v136 = vpack.c.bf16 %v119, %v119
    %v137 = vpack.c.bf16 %v121, %v121
    %v138 = vld [vmem:[#allocation2] sm:$0xf]
    %v139 = vld [vmem:[#allocation2 + $0x4] sm:$0xf]
    %v140 = vld [vmem:[#allocation2 + $0x8] sm:$0xf]
    %v141 = vld [vmem:[#allocation2 + $0xc] sm:$0xf]
    %v142 = vld [vmem:[#allocation2 + $0x10] sm:$0xf]
    %v143 = vld [vmem:[#allocation2 + $0x14] sm:$0xf]
    %v144 = vld [vmem:[#allocation2 + $0x18] sm:$0xf]
    %v145 = vld [vmem:[#allocation2 + $0x1c] sm:$0xf]
    %v146 = vld [vmem:[#allocation2 + $0x20] sm:$0xf]
    %v147 = vld [vmem:[#allocation2 + $0x24] sm:$0xf]
    %v148 = vld [vmem:[#allocation2 + $0x28] sm:$0xf]
    %v149 = vld [vmem:[#allocation2 + $0x2c] sm:$0xf]
    %v150 = vld [vmem:[#allocation2 + $0x30] sm:$0xf]
    %v151 = vld [vmem:[#allocation2 + $0x34] sm:$0xf]
    %v152 = vld [vmem:[#allocation2 + $0x38] sm:$0xf]
    %v153 = vld [vmem:[#allocation2 + $0x3c] sm:$0xf]
    %v154 = vld [vmem:[#allocation2 + $0x40] sm:$0xf]
    %v155 = vld [vmem:[#allocation2 + $0x44] sm:$0xf]
    %v156 = vld [vmem:[#allocation2 + $0x48] sm:$0xf]
    %v157 = vld [vmem:[#allocation2 + $0x4c] sm:$0xf]
    %v158 = vld [vmem:[#allocation2 + $0x50] sm:$0xf]
    %v159 = vld [vmem:[#allocation2 + $0x54] sm:$0xf]
    %v160 = vld [vmem:[#allocation2 + $0x58] sm:$0xf]
    %v161 = vld [vmem:[#allocation2 + $0x5c] sm:$0xf]
    %v162 = vld [vmem:[#allocation2 + $0x60] sm:$0xf]
    %v163 = vld [vmem:[#allocation2 + $0x64] sm:$0xf]
    %v164 = vld [vmem:[#allocation2 + $0x68] sm:$0xf]
    %v165 = vld [vmem:[#allocation2 + $0x6c] sm:$0xf]
    %v166 = vld [vmem:[#allocation2 + $0x70] sm:$0xf]
    %v167 = vld [vmem:[#allocation2 + $0x74] sm:$0xf]
    %v168 = vld [vmem:[#allocation2 + $0x78] sm:$0xf]
    %v169 = vld [vmem:[#allocation2 + $0x7c] sm:$0xf]
    %v170 = vld [vmem:[#allocation2 + $0x80] sm:$0xf]
    %v171 = vld [vmem:[#allocation2 + $0x84] sm:$0xf]
    %v172 = vld [vmem:[#allocation2 + $0x88] sm:$0xf]
    %v173 = vld [vmem:[#allocation2 + $0x8c] sm:$0xf]
    %v174 = vld [vmem:[#allocation2 + $0x90] sm:$0xf]
    %v175 = vld [vmem:[#allocation2 + $0x94] sm:$0xf]
    %v176 = vld [vmem:[#allocation2 + $0x98] sm:$0xf]
    %v177 = vld [vmem:[#allocation2 + $0x9c] sm:$0xf]
    %v178 = vld [vmem:[#allocation2 + $0xa0] sm:$0xf]
    %v179 = vld [vmem:[#allocation2 + $0xa4] sm:$0xf]
    %v180 = vld [vmem:[#allocation2 + $0xa8] sm:$0xf]
    %v181 = vld [vmem:[#allocation2 + $0xac] sm:$0xf]
    %v182 = vld [vmem:[#allocation2 + $0xb0] sm:$0xf]
    %v183 = vld [vmem:[#allocation2 + $0xb4] sm:$0xf]
    %v184 = vld [vmem:[#allocation2 + $0xb8] sm:$0xf]
    %v185 = vld [vmem:[#allocation2 + $0xbc] sm:$0xf]
    %v186 = vld [vmem:[#allocation2 + $0xc0] sm:$0xf]
    %v187 = vld [vmem:[#allocation2 + $0xc4] sm:$0xf]
    %v188 = vld [vmem:[#allocation2 + $0xc8] sm:$0xf]
    %v189 = vld [vmem:[#allocation2 + $0xcc] sm:$0xf]
    %v190 = vld [vmem:[#allocation2 + $0xd0] sm:$0xf]
    %v191 = vld [vmem:[#allocation2 + $0xd4] sm:$0xf]
    %v192 = vld [vmem:[#allocation2 + $0xd8] sm:$0xf]
    %v193 = vld [vmem:[#allocation2 + $0xdc] sm:$0xf]
    %v194 = vld [vmem:[#allocation2 + $0xe0] sm:$0xf]
    %v195 = vld [vmem:[#allocation2 + $0xe4] sm:$0xf]
    %v196 = vld [vmem:[#allocation2 + $0xe8] sm:$0xf]
    %v197 = vld [vmem:[#allocation2 + $0xec] sm:$0xf]
    %v198 = vld [vmem:[#allocation2 + $0xf0] sm:$0xf]
    %v199 = vld [vmem:[#allocation2 + $0xf4] sm:$0xf]
    %v200 = vld [vmem:[#allocation2 + $0xf8] sm:$0xf]
    %v201 = vld [vmem:[#allocation2 + $0xfc] sm:$0xf]
    %v202 = vld [vmem:[#allocation2 + $0x100] sm:$0xf]
    %v203 = vld [vmem:[#allocation2 + $0x104] sm:$0xf]
    %v204 = vld [vmem:[#allocation2 + $0x108] sm:$0xf]
    %v205 = vld [vmem:[#allocation2 + $0x10c] sm:$0xf]
    %v206 = vld [vmem:[#allocation2 + $0x110] sm:$0xf]
    %v207 = vld [vmem:[#allocation2 + $0x114] sm:$0xf]
    %v208 = vld [vmem:[#allocation2 + $0x118] sm:$0xf]
    %v209 = vld [vmem:[#allocation2 + $0x11c] sm:$0xf]
    %v210 = vld [vmem:[#allocation2 + $0x120] sm:$0xf]
    %v211 = vld [vmem:[#allocation2 + $0x124] sm:$0xf]
    %v212 = vld [vmem:[#allocation2 + $0x128] sm:$0xf]
    %v213 = vld [vmem:[#allocation2 + $0x12c] sm:$0xf]
    %v214 = vld [vmem:[#allocation2 + $0x130] sm:$0xf]
    %v215 = vld [vmem:[#allocation2 + $0x134] sm:$0xf]
    %v216 = vld [vmem:[#allocation2 + $0x138] sm:$0xf]
    %v217 = vld [vmem:[#allocation2 + $0x13c] sm:$0xf]
    %v218 = vld [vmem:[#allocation2 + $0x140] sm:$0xf]
    %v219 = vld [vmem:[#allocation2 + $0x144] sm:$0xf]
    %v220 = vld [vmem:[#allocation2 + $0x148] sm:$0xf]
    %v221 = vld [vmem:[#allocation2 + $0x14c] sm:$0xf]
    %v222 = vld [vmem:[#allocation2 + $0x150] sm:$0xf]
    %v223 = vld [vmem:[#allocation2 + $0x154] sm:$0xf]
    %v224 = vld [vmem:[#allocation2 + $0x158] sm:$0xf]
    %v225 = vld [vmem:[#allocation2 + $0x15c] sm:$0xf]
    %v226 = vld [vmem:[#allocation2 + $0x160] sm:$0xf]
    %v227 = vld [vmem:[#allocation2 + $0x164] sm:$0xf]
    %v228 = vld [vmem:[#allocation2 + $0x168] sm:$0xf]
    %v229 = vld [vmem:[#allocation2 + $0x16c] sm:$0xf]
    %v230 = vld [vmem:[#allocation2 + $0x170] sm:$0xf]
    %v231 = vld [vmem:[#allocation2 + $0x174] sm:$0xf]
    %v232 = vld [vmem:[#allocation2 + $0x178] sm:$0xf]
    %v233 = vld [vmem:[#allocation2 + $0x17c] sm:$0xf]
    %v234 = vld [vmem:[#allocation2 + $0x180] sm:$0xf]
    %v235 = vld [vmem:[#allocation2 + $0x184] sm:$0xf]
    %v236 = vld [vmem:[#allocation2 + $0x188] sm:$0xf]
    %v237 = vld [vmem:[#allocation2 + $0x18c] sm:$0xf]
    %v238 = vld [vmem:[#allocation2 + $0x190] sm:$0xf]
    %v239 = vld [vmem:[#allocation2 + $0x194] sm:$0xf]
    %v240 = vld [vmem:[#allocation2 + $0x198] sm:$0xf]
    %v241 = vld [vmem:[#allocation2 + $0x19c] sm:$0xf]
    %v242 = vld [vmem:[#allocation2 + $0x1a0] sm:$0xf]
    %v243 = vld [vmem:[#allocation2 + $0x1a4] sm:$0xf]
    %v244 = vld [vmem:[#allocation2 + $0x1a8] sm:$0xf]
    %v245 = vld [vmem:[#allocation2 + $0x1ac] sm:$0xf]
    %v246 = vld [vmem:[#allocation2 + $0x1b0] sm:$0xf]
    %v247 = vld [vmem:[#allocation2 + $0x1b4] sm:$0xf]
    %v248 = vld [vmem:[#allocation2 + $0x1b8] sm:$0xf]
    %v249 = vld [vmem:[#allocation2 + $0x1bc] sm:$0xf]
    %v250 = vld [vmem:[#allocation2 + $0x1c0] sm:$0xf]
    %v251 = vld [vmem:[#allocation2 + $0x1c4] sm:$0xf]
    %v252 = vld [vmem:[#allocation2 + $0x1c8] sm:$0xf]
    %v253 = vld [vmem:[#allocation2 + $0x1cc] sm:$0xf]
    %v254 = vld [vmem:[#allocation2 + $0x1d0] sm:$0xf]
    %v255 = vld [vmem:[#allocation2 + $0x1d4] sm:$0xf]
    %v256 = vld [vmem:[#allocation2 + $0x1d8] sm:$0xf]
    %v257 = vld [vmem:[#allocation2 + $0x1dc] sm:$0xf]
    %v258 = vld [vmem:[#allocation2 + $0x1e0] sm:$0xf]
    %v259 = vld [vmem:[#allocation2 + $0x1e4] sm:$0xf]
    %v260 = vld [vmem:[#allocation2 + $0x1e8] sm:$0xf]
    %v261 = vld [vmem:[#allocation2 + $0x1ec] sm:$0xf]
    %v262 = vld [vmem:[#allocation2 + $0x1f0] sm:$0xf]
    %v263 = vld [vmem:[#allocation2 + $0x1f4] sm:$0xf]
    %v264 = vld [vmem:[#allocation2 + $0x1f8] sm:$0xf]
    %v265 = vld [vmem:[#allocation2 + $0x1fc] sm:$0xf]
    %v266 = vld [vmem:[%s3] sm:$0x1]
    %v268 = vlaneseq
    %v269 = vshrl.u32 %v268, 7
    %v270 = vsub.s32 0, %v269
    %v271 = vrot.slane %v266, %v270
    %v401 = vunpack.c.l.b16 %v138
    %v402 = vunpack.c.l.b16 %v139
    %v403 = vunpack.c.l.b16 %v140
    %v404 = vunpack.c.l.b16 %v141
    %v405 = vunpack.c.l.b16 %v142
    %v406 = vunpack.c.l.b16 %v143
    %v407 = vunpack.c.l.b16 %v144
    %v408 = vunpack.c.l.b16 %v145
    %v409 = vunpack.c.l.b16 %v146
    %v410 = vunpack.c.l.b16 %v147
    %v411 = vunpack.c.l.b16 %v148
    %v412 = vunpack.c.l.b16 %v149
    %v413 = vunpack.c.l.b16 %v150
    %v414 = vunpack.c.l.b16 %v151
    %v415 = vunpack.c.l.b16 %v152
    %v416 = vunpack.c.l.b16 %v153
    %v417 = vunpack.c.l.b16 %v154
    %v418 = vunpack.c.l.b16 %v155
    %v419 = vunpack.c.l.b16 %v156
    %v420 = vunpack.c.l.b16 %v157
    %v421 = vunpack.c.l.b16 %v158
    %v422 = vunpack.c.l.b16 %v159
    %v423 = vunpack.c.l.b16 %v160
    %v424 = vunpack.c.l.b16 %v161
    %v425 = vunpack.c.l.b16 %v162
    %v426 = vunpack.c.l.b16 %v163
    %v427 = vunpack.c.l.b16 %v164
    %v428 = vunpack.c.l.b16 %v165
    %v429 = vunpack.c.l.b16 %v166
    %v430 = vunpack.c.l.b16 %v167
    %v431 = vunpack.c.l.b16 %v168
    %v432 = vunpack.c.l.b16 %v169
    %v433 = vunpack.c.l.b16 %v170
    %v434 = vunpack.c.l.b16 %v171
    %v435 = vunpack.c.l.b16 %v172
    %v436 = vunpack.c.l.b16 %v173
    %v437 = vunpack.c.l.b16 %v174
    %v438 = vunpack.c.l.b16 %v175
    %v439 = vunpack.c.l.b16 %v176
    %v440 = vunpack.c.l.b16 %v177
    %v441 = vunpack.c.l.b16 %v178
    %v442 = vunpack.c.l.b16 %v179
    %v443 = vunpack.c.l.b16 %v180
    %v444 = vunpack.c.l.b16 %v181
    %v445 = vunpack.c.l.b16 %v182
    %v446 = vunpack.c.l.b16 %v183
    %v447 = vunpack.c.l.b16 %v184
    %v448 = vunpack.c.l.b16 %v185
    %v449 = vunpack.c.l.b16 %v186
    %v450 = vunpack.c.l.b16 %v187
    %v451 = vunpack.c.l.b16 %v188
    %v452 = vunpack.c.l.b16 %v189
    %v453 = vunpack.c.l.b16 %v190
    %v454 = vunpack.c.l.b16 %v191
    %v455 = vunpack.c.l.b16 %v192
    %v456 = vunpack.c.l.b16 %v193
    %v457 = vunpack.c.l.b16 %v194
    %v458 = vunpack.c.l.b16 %v195
    %v459 = vunpack.c.l.b16 %v196
    %v460 = vunpack.c.l.b16 %v197
    %v461 = vunpack.c.l.b16 %v198
    %v462 = vunpack.c.l.b16 %v199
    %v463 = vunpack.c.l.b16 %v200
    %v464 = vunpack.c.l.b16 %v201
    %v465 = vunpack.c.l.b16 %v202
    %v466 = vunpack.c.l.b16 %v203
    %v467 = vunpack.c.l.b16 %v204
    %v468 = vunpack.c.l.b16 %v205
    %v469 = vunpack.c.l.b16 %v206
    %v470 = vunpack.c.l.b16 %v207
    %v471 = vunpack.c.l.b16 %v208
    %v472 = vunpack.c.l.b16 %v209
    %v473 = vunpack.c.l.b16 %v210
    %v474 = vunpack.c.l.b16 %v211
    %v475 = vunpack.c.l.b16 %v212
    %v476 = vunpack.c.l.b16 %v213
    %v477 = vunpack.c.l.b16 %v214
    %v478 = vunpack.c.l.b16 %v215
    %v479 = vunpack.c.l.b16 %v216
    %v480 = vunpack.c.l.b16 %v217
    %v481 = vunpack.c.l.b16 %v218
    %v482 = vunpack.c.l.b16 %v219
    %v483 = vunpack.c.l.b16 %v220
    %v484 = vunpack.c.l.b16 %v221
    %v485 = vunpack.c.l.b16 %v222
    %v486 = vunpack.c.l.b16 %v223
    %v487 = vunpack.c.l.b16 %v224
    %v488 = vunpack.c.l.b16 %v225
    %v489 = vunpack.c.l.b16 %v226
    %v490 = vunpack.c.l.b16 %v227
    %v491 = vunpack.c.l.b16 %v228
    %v492 = vunpack.c.l.b16 %v229
    %v493 = vunpack.c.l.b16 %v230
    %v494 = vunpack.c.l.b16 %v231
    %v495 = vunpack.c.l.b16 %v232
    %v496 = vunpack.c.l.b16 %v233
    %v497 = vunpack.c.l.b16 %v234
    %v498 = vunpack.c.l.b16 %v235
    %v499 = vunpack.c.l.b16 %v236
    %v500 = vunpack.c.l.b16 %v237
    %v501 = vunpack.c.l.b16 %v238
    %v502 = vunpack.c.l.b16 %v239
    %v503 = vunpack.c.l.b16 %v240
    %v504 = vunpack.c.l.b16 %v241
    %v505 = vunpack.c.l.b16 %v242
    %v506 = vunpack.c.l.b16 %v243
    %v507 = vunpack.c.l.b16 %v244
    %v508 = vunpack.c.l.b16 %v245
    %v509 = vunpack.c.l.b16 %v246
    %v510 = vunpack.c.l.b16 %v247
    %v511 = vunpack.c.l.b16 %v248
    %v512 = vunpack.c.l.b16 %v249
    %v513 = vunpack.c.l.b16 %v250
    %v514 = vunpack.c.l.b16 %v251
    %v515 = vunpack.c.l.b16 %v252
    %v516 = vunpack.c.l.b16 %v253
    %v517 = vunpack.c.l.b16 %v254
    %v518 = vunpack.c.l.b16 %v255
    %v519 = vunpack.c.l.b16 %v256
    %v520 = vunpack.c.l.b16 %v257
    %v521 = vunpack.c.l.b16 %v258
    %v522 = vunpack.c.l.b16 %v259
    %v523 = vunpack.c.l.b16 %v260
    %v524 = vunpack.c.l.b16 %v261
    %v525 = vunpack.c.l.b16 %v262
    %v526 = vunpack.c.l.b16 %v263
    %v527 = vunpack.c.l.b16 %v264
    %v528 = vunpack.c.l.b16 %v265
    %v529 = vpack.c.b16 %v402, %v401
    %v530 = vpack.c.b16 %v404, %v403
    %v531 = vpack.c.b16 %v406, %v405
    %v532 = vpack.c.b16 %v408, %v407
    %v533 = vpack.c.b16 %v410, %v409
    %v534 = vpack.c.b16 %v412, %v411
    %v535 = vpack.c.b16 %v414, %v413
    %v536 = vpack.c.b16 %v416, %v415
    %v537 = vpack.c.b16 %v418, %v417
    %v538 = vpack.c.b16 %v420, %v419
    %v539 = vpack.c.b16 %v422, %v421
    %v540 = vpack.c.b16 %v424, %v423
    %v541 = vpack.c.b16 %v426, %v425
    %v542 = vpack.c.b16 %v428, %v427
    %v543 = vpack.c.b16 %v430, %v429
    %v544 = vpack.c.b16 %v432, %v431
    %v545 = vpack.c.b16 %v434, %v433
    %v546 = vpack.c.b16 %v436, %v435
    %v547 = vpack.c.b16 %v438, %v437
    %v548 = vpack.c.b16 %v440, %v439
    %v549 = vpack.c.b16 %v442, %v441
    %v550 = vpack.c.b16 %v444, %v443
    %v551 = vpack.c.b16 %v446, %v445
    %v552 = vpack.c.b16 %v448, %v447
    %v553 = vpack.c.b16 %v450, %v449
    %v554 = vpack.c.b16 %v452, %v451
    %v555 = vpack.c.b16 %v454, %v453
    %v556 = vpack.c.b16 %v456, %v455
    %v557 = vpack.c.b16 %v458, %v457
    %v558 = vpack.c.b16 %v460, %v459
    %v559 = vpack.c.b16 %v462, %v461
    %v560 = vpack.c.b16 %v464, %v463
    %v561 = vpack.c.b16 %v466, %v465
    %v562 = vpack.c.b16 %v468, %v467
    %v563 = vpack.c.b16 %v470, %v469
    %v564 = vpack.c.b16 %v472, %v471
    %v565 = vpack.c.b16 %v474, %v473
    %v566 = vpack.c.b16 %v476, %v475
    %v567 = vpack.c.b16 %v478, %v477
    %v568 = vpack.c.b16 %v480, %v479
    %v569 = vpack.c.b16 %v482, %v481
    %v570 = vpack.c.b16 %v484, %v483
    %v571 = vpack.c.b16 %v486, %v485
    %v572 = vpack.c.b16 %v488, %v487
    %v573 = vpack.c.b16 %v490, %v489
    %v574 = vpack.c.b16 %v492, %v491
    %v575 = vpack.c.b16 %v494, %v493
    %v576 = vpack.c.b16 %v496, %v495
    %v577 = vpack.c.b16 %v498, %v497
    %v578 = vpack.c.b16 %v500, %v499
    %v579 = vpack.c.b16 %v502, %v501
    %v580 = vpack.c.b16 %v504, %v503
    %v581 = vpack.c.b16 %v506, %v505
    %v582 = vpack.c.b16 %v508, %v507
    %v583 = vpack.c.b16 %v510, %v509
    %v584 = vpack.c.b16 %v512, %v511
    %v585 = vpack.c.b16 %v514, %v513
    %v586 = vpack.c.b16 %v516, %v515
    %v587 = vpack.c.b16 %v518, %v517
    %v588 = vpack.c.b16 %v520, %v519
    %v589 = vpack.c.b16 %v522, %v521
    %v590 = vpack.c.b16 %v524, %v523
    %v591 = vpack.c.b16 %v526, %v525
    %v592 = vpack.c.b16 %v528, %v527
    %657 = vmatprep.subr.bf16.mxu0 0
    %658 = vmatpush1.bf16.msra.mxu0 %v536
    %659 = vmatprep.subr.bf16.mxu0 0
    %660 = vmatpush1.bf16.msra.mxu0 %v535
    %661 = vmatprep.subr.bf16.mxu0 0
    %662 = vmatpush1.bf16.msra.mxu0 %v534
    %663 = vmatprep.subr.bf16.mxu0 0
    %664 = vmatpush1.bf16.msra.mxu0 %v533
    %665 = vmatprep.subr.bf16.mxu0 0
    %666 = vmatpush1.bf16.msra.mxu0 %v532
    %667 = vmatprep.subr.bf16.mxu0 0
    %668 = vmatpush1.bf16.msra.mxu0 %v531
    %669 = vmatprep.subr.bf16.mxu0 0
    %670 = vmatpush1.bf16.msra.mxu0 %v530
    %671 = vmatprep.subr.bf16.mxu0 0
    %672 = vmatpush1.bf16.msra.mxu0 %v529
    %673 = vmatprep.subr.bf16.mxu0 0
    %674 = vmatpush2.bf16.msra.mxu0 %v544
    %675 = vmatprep.subr.bf16.mxu0 0
    %676 = vmatpush2.bf16.msra.mxu0 %v543
    %677 = vmatprep.subr.bf16.mxu0 0
    %678 = vmatpush2.bf16.msra.mxu0 %v542
    %679 = vmatprep.subr.bf16.mxu0 0
    %680 = vmatpush2.bf16.msra.mxu0 %v541
    %681 = vmatprep.subr.bf16.mxu0 0
    %682 = vmatpush2.bf16.msra.mxu0 %v540
    %683 = vmatprep.subr.bf16.mxu0 0
    %684 = vmatpush2.bf16.msra.mxu0 %v539
    %685 = vmatprep.subr.bf16.mxu0 0
    %686 = vmatpush2.bf16.msra.mxu0 %v538
    %687 = vmatprep.subr.bf16.mxu0 0
    %688 = vmatpush2.bf16.msra.mxu0 %v537
    %689 = vmatprep.mubr.bf16.mxu0 %v131
    %690 = vmatmul.mubr.bf16.gmra.mxu0 %v130
    %v691 = vpop.f32.mrf.mxu0
    %v692 = vadd.f32 %v271, %v691
    %v693 = vpop.f32.mrf.mxu0
    %v694 = vpop.f32.mrf.mxu0
    %v695 = vpop.f32.mrf.mxu0
    %696 = vdwg.mxu0
    %697 = vmatprep.subr.bf16.mxu0 0
    %698 = vmatpush1.bf16.msra.mxu0 %v552
    %699 = vmatprep.subr.bf16.mxu0 0
    %700 = vmatpush1.bf16.msra.mxu0 %v551
    %701 = vmatprep.subr.bf16.mxu0 0
    %702 = vmatpush1.bf16.msra.mxu0 %v550
    %703 = vmatprep.subr.bf16.mxu0 0
    %704 = vmatpush1.bf16.msra.mxu0 %v549
    %705 = vmatprep.subr.bf16.mxu0 0
    %706 = vmatpush1.bf16.msra.mxu0 %v548
    %707 = vmatprep.subr.bf16.mxu0 0
    %708 = vmatpush1.bf16.msra.mxu0 %v547
    %709 = vmatprep.subr.bf16.mxu0 0
    %710 = vmatpush1.bf16.msra.mxu0 %v546
    %711 = vmatprep.subr.bf16.mxu0 0
    %712 = vmatpush1.bf16.msra.mxu0 %v545
    %713 = vmatprep.subr.bf16.mxu0 0
    %714 = vmatpush2.bf16.msra.mxu0 %v560
    %715 = vmatprep.subr.bf16.mxu0 0
    %716 = vmatpush2.bf16.msra.mxu0 %v559
    %717 = vmatprep.subr.bf16.mxu0 0
    %718 = vmatpush2.bf16.msra.mxu0 %v558
    %719 = vmatprep.subr.bf16.mxu0 0
    %720 = vmatpush2.bf16.msra.mxu0 %v557
    %721 = vmatprep.subr.bf16.mxu0 0
    %722 = vmatpush2.bf16.msra.mxu0 %v556
    %723 = vmatprep.subr.bf16.mxu0 0
    %724 = vmatpush2.bf16.msra.mxu0 %v555
    %725 = vmatprep.subr.bf16.mxu0 0
    %726 = vmatpush2.bf16.msra.mxu0 %v554
    %727 = vmatprep.subr.bf16.mxu0 0
    %728 = vmatpush2.bf16.msra.mxu0 %v553
    %729 = vmatprep.mubr.bf16.mxu0 %v133
    %730 = vmatmul.mubr.bf16.gmra.mxu0 %v132
    %v731 = vpop.f32.mrf.mxu0
    %v732 = vadd.f32 %v692, %v731
    %v733 = vpop.f32.mrf.mxu0
    %v734 = vpop.f32.mrf.mxu0
    %v735 = vpop.f32.mrf.mxu0
    %736 = vdwg.mxu0
    %737 = vmatprep.subr.bf16.mxu0 0
    %738 = vmatpush1.bf16.msra.mxu0 %v568
    %739 = vmatprep.subr.bf16.mxu0 0
    %740 = vmatpush1.bf16.msra.mxu0 %v567
    %741 = vmatprep.subr.bf16.mxu0 0
    %742 = vmatpush1.bf16.msra.mxu0 %v566
    %743 = vmatprep.subr.bf16.mxu0 0
    %744 = vmatpush1.bf16.msra.mxu0 %v565
    %745 = vmatprep.subr.bf16.mxu0 0
    %746 = vmatpush1.bf16.msra.mxu0 %v564
    %747 = vmatprep.subr.bf16.mxu0 0
    %748 = vmatpush1.bf16.msra.mxu0 %v563
    %749 = vmatprep.subr.bf16.mxu0 0
    %750 = vmatpush1.bf16.msra.mxu0 %v562
    %751 = vmatprep.subr.bf16.mxu0 0
    %752 = vmatpush1.bf16.msra.mxu0 %v561
    %753 = vmatprep.subr.bf16.mxu0 0
    %754 = vmatpush2.bf16.msra.mxu0 %v576
    %755 = vmatprep.subr.bf16.mxu0 0
    %756 = vmatpush2.bf16.msra.mxu0 %v575
    %757 = vmatprep.subr.bf16.mxu0 0
    %758 = vmatpush2.bf16.msra.mxu0 %v574
    %759 = vmatprep.subr.bf16.mxu0 0
    %760 = vmatpush2.bf16.msra.mxu0 %v573
    %761 = vmatprep.subr.bf16.mxu0 0
    %762 = vmatpush2.bf16.msra.mxu0 %v572
    %763 = vmatprep.subr.bf16.mxu0 0
    %764 = vmatpush2.bf16.msra.mxu0 %v571
    %765 = vmatprep.subr.bf16.mxu0 0
    %766 = vmatpush2.bf16.msra.mxu0 %v570
    %767 = vmatprep.subr.bf16.mxu0 0
    %768 = vmatpush2.bf16.msra.mxu0 %v569
    %769 = vmatprep.mubr.bf16.mxu0 %v135
    %770 = vmatmul.mubr.bf16.gmra.mxu0 %v134
    %v771 = vpop.f32.mrf.mxu0
    %v772 = vadd.f32 %v732, %v771
    %v773 = vpop.f32.mrf.mxu0
    %v774 = vpop.f32.mrf.mxu0
    %v775 = vpop.f32.mrf.mxu0
    %776 = vdwg.mxu0
    %777 = vmatprep.subr.bf16.mxu0 0
    %778 = vmatpush1.bf16.msra.mxu0 %v584
    %779 = vmatprep.subr.bf16.mxu0 0
    %780 = vmatpush1.bf16.msra.mxu0 %v583
    %781 = vmatprep.subr.bf16.mxu0 0
    %782 = vmatpush1.bf16.msra.mxu0 %v582
    %783 = vmatprep.subr.bf16.mxu0 0
    %784 = vmatpush1.bf16.msra.mxu0 %v581
    %785 = vmatprep.subr.bf16.mxu0 0
    %786 = vmatpush1.bf16.msra.mxu0 %v580
    %787 = vmatprep.subr.bf16.mxu0 0
    %788 = vmatpush1.bf16.msra.mxu0 %v579
    %789 = vmatprep.subr.bf16.mxu0 0
    %790 = vmatpush1.bf16.msra.mxu0 %v578
    %791 = vmatprep.subr.bf16.mxu0 0
    %792 = vmatpush1.bf16.msra.mxu0 %v577
    %793 = vmatprep.subr.bf16.mxu0 0
    %794 = vmatpush2.bf16.msra.mxu0 %v592
    %795 = vmatprep.subr.bf16.mxu0 0
    %796 = vmatpush2.bf16.msra.mxu0 %v591
    %797 = vmatprep.subr.bf16.mxu0 0
    %798 = vmatpush2.bf16.msra.mxu0 %v590
    %799 = vmatprep.subr.bf16.mxu0 0
    %800 = vmatpush2.bf16.msra.mxu0 %v589
    %801 = vmatprep.subr.bf16.mxu0 0
    %802 = vmatpush2.bf16.msra.mxu0 %v588
    %803 = vmatprep.subr.bf16.mxu0 0
    %804 = vmatpush2.bf16.msra.mxu0 %v587
    %805 = vmatprep.subr.bf16.mxu0 0
    %806 = vmatpush2.bf16.msra.mxu0 %v586
    %807 = vmatprep.subr.bf16.mxu0 0
    %808 = vmatpush2.bf16.msra.mxu0 %v585
    %809 = vmatprep.mubr.bf16.mxu0 %v137
    %810 = vmatmul.mubr.bf16.gmra.mxu0 %v136
    %v811 = vpop.f32.mrf.mxu0
    %v812 = vadd.f32 %v772, %v811
    %v813 = vpop.f32.mrf.mxu0
    %v814 = vpop.f32.mrf.mxu0
    %v815 = vpop.f32.mrf.mxu0
    %816 = vdwg.mxu0
    %v817 = vmax.f32 %v812, 0.0
    %v818 = vpack.c.bf16 %v817, %v817
    %v819 = vld [vmem:[%s4] sm:$0xff]
    %v820 = vld [vmem:[%s4 + $0x8] sm:$0xff]
    %v821 = vld [vmem:[%s4 + $0x10] sm:$0xff]
    %v822 = vld [vmem:[%s4 + $0x18] sm:$0xff]
    %v823 = vld [vmem:[%s4 + $0x20] sm:$0xff]
    %v824 = vld [vmem:[%s4 + $0x28] sm:$0xff]
    %v825 = vld [vmem:[%s4 + $0x30] sm:$0xff]
    %v826 = vld [vmem:[%s4 + $0x38] sm:$0xff]
    %v827 = vld [vmem:[%s4 + $0x40] sm:$0xff]
    %v828 = vld [vmem:[%s4 + $0x48] sm:$0xff]
    %v829 = vld [vmem:[%s4 + $0x50] sm:$0xff]
    %v830 = vld [vmem:[%s4 + $0x58] sm:$0xff]
    %v831 = vld [vmem:[%s4 + $0x60] sm:$0xff]
    %v832 = vld [vmem:[%s4 + $0x68] sm:$0xff]
    %v833 = vld [vmem:[%s4 + $0x70] sm:$0xff]
    %v834 = vld [vmem:[%s4 + $0x78] sm:$0xff]
    %v835 = vld [vmem:[%s5] sm:$0x3]
    %v837 = vlaneseq
    %v838 = vshrl.u32 %v837, 7
    %v839 = vsub.s32 0, %v838
    %v840 = vrot.slane %v835, %v839
    %v841 = vlaneseq
    %v842 = vshrl.u32 %v841, 7
    %v843 = vsub.s32 1, %v842
    %v844 = vrot.slane %v835, %v843
    %v863 = vunpack.c.l.b16 %v819
    %v864 = vunpack.c.h.b16 %v819
    %v865 = vunpack.c.l.b16 %v820
    %v866 = vunpack.c.h.b16 %v820
    %v867 = vunpack.c.l.b16 %v821
    %v868 = vunpack.c.h.b16 %v821
    %v869 = vunpack.c.l.b16 %v822
    %v870 = vunpack.c.h.b16 %v822
    %v871 = vunpack.c.l.b16 %v823
    %v872 = vunpack.c.h.b16 %v823
    %v873 = vunpack.c.l.b16 %v824
    %v874 = vunpack.c.h.b16 %v824
    %v875 = vunpack.c.l.b16 %v825
    %v876 = vunpack.c.h.b16 %v825
    %v877 = vunpack.c.l.b16 %v826
    %v878 = vunpack.c.h.b16 %v826
    %v879 = vunpack.c.l.b16 %v827
    %v880 = vunpack.c.h.b16 %v827
    %v881 = vunpack.c.l.b16 %v828
    %v882 = vunpack.c.h.b16 %v828
    %v883 = vunpack.c.l.b16 %v829
    %v884 = vunpack.c.h.b16 %v829
    %v885 = vunpack.c.l.b16 %v830
    %v886 = vunpack.c.h.b16 %v830
    %v887 = vunpack.c.l.b16 %v831
    %v888 = vunpack.c.h.b16 %v831
    %v889 = vunpack.c.l.b16 %v832
    %v890 = vunpack.c.h.b16 %v832
    %v891 = vunpack.c.l.b16 %v833
    %v892 = vunpack.c.h.b16 %v833
    %v893 = vunpack.c.l.b16 %v834
    %v894 = vunpack.c.h.b16 %v834
    %v895 = vpack.c.b16 %v865, %v863
    %v896 = vpack.c.b16 %v866, %v864
    %v897 = vpack.c.b16 %v869, %v867
    %v898 = vpack.c.b16 %v870, %v868
    %v899 = vpack.c.b16 %v873, %v871
    %v900 = vpack.c.b16 %v874, %v872
    %v901 = vpack.c.b16 %v877, %v875
    %v902 = vpack.c.b16 %v878, %v876
    %v903 = vpack.c.b16 %v881, %v879
    %v904 = vpack.c.b16 %v882, %v880
    %v905 = vpack.c.b16 %v885, %v883
    %v906 = vpack.c.b16 %v886, %v884
    %v907 = vpack.c.b16 %v889, %v887
    %v908 = vpack.c.b16 %v890, %v888
    %v909 = vpack.c.b16 %v893, %v891
    %v910 = vpack.c.b16 %v894, %v892
    %927 = vmatprep.subr.bf16.mxu0 %v910
    %928 = vmatpush1.bf16.msra.mxu0 %v909
    %929 = vmatprep.subr.bf16.mxu0 %v908
    %930 = vmatpush1.bf16.msra.mxu0 %v907
    %931 = vmatprep.subr.bf16.mxu0 %v906
    %932 = vmatpush1.bf16.msra.mxu0 %v905
    %933 = vmatprep.subr.bf16.mxu0 %v904
    %934 = vmatpush1.bf16.msra.mxu0 %v903
    %935 = vmatprep.subr.bf16.mxu0 %v902
    %936 = vmatpush1.bf16.msra.mxu0 %v901
    %937 = vmatprep.subr.bf16.mxu0 %v900
    %938 = vmatpush1.bf16.msra.mxu0 %v899
    %939 = vmatprep.subr.bf16.mxu0 %v898
    %940 = vmatpush1.bf16.msra.mxu0 %v897
    %941 = vmatprep.subr.bf16.mxu0 %v896
    %942 = vmatpush1.bf16.msra.mxu0 %v895
    %943 = vmatprep.subr.bf16.mxu0 0
    %944 = vmatpush2.bf16.msra.mxu0 0
    %945 = vmatprep.subr.bf16.mxu0 0
    %946 = vmatpush2.bf16.msra.mxu0 0
    %947 = vmatprep.subr.bf16.mxu0 0
    %948 = vmatpush2.bf16.msra.mxu0 0
    %949 = vmatprep.subr.bf16.mxu0 0
    %950 = vmatpush2.bf16.msra.mxu0 0
    %951 = vmatprep.subr.bf16.mxu0 0
    %952 = vmatpush2.bf16.msra.mxu0 0
    %953 = vmatprep.subr.bf16.mxu0 0
    %954 = vmatpush2.bf16.msra.mxu0 0
    %955 = vmatprep.subr.bf16.mxu0 0
    %956 = vmatpush2.bf16.msra.mxu0 0
    %957 = vmatprep.subr.bf16.mxu0 0
    %958 = vmatpush2.bf16.msra.mxu0 0
    %959 = vmatprep.mubr.bf16.mxu0 0
    %960 = vmatmul.mubr.bf16.gmra.mxu0 %v818
    %v961 = vpop.f32.mrf.mxu0
    %v962 = vadd.f32 %v840, %v961
    %v963 = vpop.f32.mrf.mxu0
    %v964 = vadd.f32 %v844, %v963
    %v965 = vpop.f32.mrf.mxu0
    %v966 = vpop.f32.mrf.mxu0
    %967 = vdwg.mxu0
    %v968 = vmax.f32 %v962, 0.0
    %v969 = vmax.f32 %v964, 0.0
    %v970 = vpack.c.bf16 %v968, %v968
    %v971 = vpack.c.bf16 %v969, %v969
    %v972 = vld [vmem:[#allocation5] sm:$0xf]
    %v973 = vld [vmem:[#allocation5 + $0x4] sm:$0xf]
    %v974 = vld [vmem:[#allocation5 + $0x8] sm:$0xf]
    %v975 = vld [vmem:[#allocation5 + $0xc] sm:$0xf]
    %v976 = vld [vmem:[#allocation5 + $0x10] sm:$0xf]
    %v977 = vld [vmem:[#allocation5 + $0x14] sm:$0xf]
    %v978 = vld [vmem:[#allocation5 + $0x18] sm:$0xf]
    %v979 = vld [vmem:[#allocation5 + $0x1c] sm:$0xf]
    %v980 = vld [vmem:[#allocation5 + $0x20] sm:$0xf]
    %v981 = vld [vmem:[#allocation5 + $0x24] sm:$0xf]
    %v982 = vld [vmem:[#allocation5 + $0x28] sm:$0xf]
    %v983 = vld [vmem:[#allocation5 + $0x2c] sm:$0xf]
    %v984 = vld [vmem:[#allocation5 + $0x30] sm:$0xf]
    %v985 = vld [vmem:[#allocation5 + $0x34] sm:$0xf]
    %v986 = vld [vmem:[#allocation5 + $0x38] sm:$0xf]
    %v987 = vld [vmem:[#allocation5 + $0x3c] sm:$0xf]
    %v988 = vld [vmem:[%s7] sm:$0x1]
    %v990 = vlaneseq
    %v991 = vshrl.u32 %v990, 7
    %v992 = vsub.s32 0, %v991
    %v993 = vrot.slane %v988, %v992
    %v1011 = vunpack.c.l.b16 %v972
    %v1012 = vunpack.c.l.b16 %v973
    %v1013 = vunpack.c.l.b16 %v974
    %v1014 = vunpack.c.l.b16 %v975
    %v1015 = vunpack.c.l.b16 %v976
    %v1016 = vunpack.c.l.b16 %v977
    %v1017 = vunpack.c.l.b16 %v978
    %v1018 = vunpack.c.l.b16 %v979
    %v1019 = vunpack.c.l.b16 %v980
    %v1020 = vunpack.c.l.b16 %v981
    %v1021 = vunpack.c.l.b16 %v982
    %v1022 = vunpack.c.l.b16 %v983
    %v1023 = vunpack.c.l.b16 %v984
    %v1024 = vunpack.c.l.b16 %v985
    %v1025 = vunpack.c.l.b16 %v986
    %v1026 = vunpack.c.l.b16 %v987
    %v1027 = vpack.c.b16 %v1012, %v1011
    %v1028 = vpack.c.b16 %v1014, %v1013
    %v1029 = vpack.c.b16 %v1016, %v1015
    %v1030 = vpack.c.b16 %v1018, %v1017
    %v1031 = vpack.c.b16 %v1020, %v1019
    %v1032 = vpack.c.b16 %v1022, %v1021
    %v1033 = vpack.c.b16 %v1024, %v1023
    %v1034 = vpack.c.b16 %v1026, %v1025
    %1043 = vmatprep.subr.bf16.mxu0 0
    %1044 = vmatpush1.bf16.msra.mxu0 %v1034
    %1045 = vmatprep.subr.bf16.mxu0 0
    %1046 = vmatpush1.bf16.msra.mxu0 %v1033
    %1047 = vmatprep.subr.bf16.mxu0 0
    %1048 = vmatpush1.bf16.msra.mxu0 %v1032
    %1049 = vmatprep.subr.bf16.mxu0 0
    %1050 = vmatpush1.bf16.msra.mxu0 %v1031
    %1051 = vmatprep.subr.bf16.mxu0 0
    %1052 = vmatpush1.bf16.msra.mxu0 %v1030
    %1053 = vmatprep.subr.bf16.mxu0 0
    %1054 = vmatpush1.bf16.msra.mxu0 %v1029
    %1055 = vmatprep.subr.bf16.mxu0 0
    %1056 = vmatpush1.bf16.msra.mxu0 %v1028
    %1057 = vmatprep.subr.bf16.mxu0 0
    %1058 = vmatpush1.bf16.msra.mxu0 %v1027
    %1059 = vmatprep.subr.bf16.mxu0 0
    %1060 = vmatpush2.bf16.msra.mxu0 0
    %1061 = vmatprep.subr.bf16.mxu0 0
    %1062 = vmatpush2.bf16.msra.mxu0 0
    %1063 = vmatprep.subr.bf16.mxu0 0
    %1064 = vmatpush2.bf16.msra.mxu0 0
    %1065 = vmatprep.subr.bf16.mxu0 0
    %1066 = vmatpush2.bf16.msra.mxu0 0
    %1067 = vmatprep.subr.bf16.mxu0 0
    %1068 = vmatpush2.bf16.msra.mxu0 0
    %1069 = vmatprep.subr.bf16.mxu0 0
    %1070 = vmatpush2.bf16.msra.mxu0 0
    %1071 = vmatprep.subr.bf16.mxu0 0
    %1072 = vmatpush2.bf16.msra.mxu0 0
    %1073 = vmatprep.subr.bf16.mxu0 0
    %1074 = vmatpush2.bf16.msra.mxu0 0
    %1075 = vmatprep.mubr.bf16.mxu0 0
    %1076 = vmatmul.mubr.bf16.gmra.mxu0 %v970
    %v1077 = vpop.f32.mrf.mxu0
    %v1078 = vadd.f32 %v993, %v1077
    %v1079 = vpop.f32.mrf.mxu0
    %v1080 = vpop.f32.mrf.mxu0
    %v1081 = vpop.f32.mrf.mxu0
    %1082 = vdwg.mxu0
    %v1083 = vmul.f32 %v1078, %v1078
    %vm1084 = vcmask 1041408
    %v1085 = vsel %vm1084, %v1083, 0.0
    %1086 = vadd.xlane.f32.xlu0 %v1085
    %v1087 = vpop.xlane.xlu0 %1086
    %v1088 = vmax.f32 %v1087, 1e-24
    %v1089 = vrsqrt.pop %v1088
    %v1090 = vmul.f32 %v1078, %v1089
    %v1091 = vld [vmem:[#allocation7] sm:$0xf]
    %v1092 = vld [vmem:[#allocation7 + $0x4] sm:$0xf]
    %v1093 = vld [vmem:[#allocation7 + $0x8] sm:$0xf]
    %v1094 = vld [vmem:[#allocation7 + $0xc] sm:$0xf]
    %v1095 = vld [vmem:[#allocation7 + $0x10] sm:$0xf]
    %v1096 = vld [vmem:[#allocation7 + $0x14] sm:$0xf]
    %v1097 = vld [vmem:[#allocation7 + $0x18] sm:$0xf]
    %v1098 = vld [vmem:[#allocation7 + $0x1c] sm:$0xf]
    %v1099 = vld [vmem:[#allocation7 + $0x20] sm:$0xf]
    %v1100 = vld [vmem:[#allocation7 + $0x24] sm:$0xf]
    %v1101 = vld [vmem:[#allocation7 + $0x28] sm:$0xf]
    %v1102 = vld [vmem:[#allocation7 + $0x2c] sm:$0xf]
    %v1103 = vld [vmem:[#allocation7 + $0x30] sm:$0xf]
    %v1104 = vld [vmem:[#allocation7 + $0x34] sm:$0xf]
    %v1105 = vld [vmem:[#allocation7 + $0x38] sm:$0xf]
    %v1106 = vld [vmem:[#allocation7 + $0x3c] sm:$0xf]
    %v1107 = vld [vmem:[%s9] sm:$0x1]
    %v1109 = vlaneseq
    %v1110 = vshrl.u32 %v1109, 7
    %v1111 = vsub.s32 0, %v1110
    %v1112 = vrot.slane %v1107, %v1111
    %v1130 = vunpack.c.l.b16 %v1091
    %v1131 = vunpack.c.l.b16 %v1092
    %v1132 = vunpack.c.l.b16 %v1093
    %v1133 = vunpack.c.l.b16 %v1094
    %v1134 = vunpack.c.l.b16 %v1095
    %v1135 = vunpack.c.l.b16 %v1096
    %v1136 = vunpack.c.l.b16 %v1097
    %v1137 = vunpack.c.l.b16 %v1098
    %v1138 = vunpack.c.l.b16 %v1099
    %v1139 = vunpack.c.l.b16 %v1100
    %v1140 = vunpack.c.l.b16 %v1101
    %v1141 = vunpack.c.l.b16 %v1102
    %v1142 = vunpack.c.l.b16 %v1103
    %v1143 = vunpack.c.l.b16 %v1104
    %v1144 = vunpack.c.l.b16 %v1105
    %v1145 = vunpack.c.l.b16 %v1106
    %v1146 = vpack.c.b16 %v1131, %v1130
    %v1147 = vpack.c.b16 %v1133, %v1132
    %v1148 = vpack.c.b16 %v1135, %v1134
    %v1149 = vpack.c.b16 %v1137, %v1136
    %v1150 = vpack.c.b16 %v1139, %v1138
    %v1151 = vpack.c.b16 %v1141, %v1140
    %v1152 = vpack.c.b16 %v1143, %v1142
    %v1153 = vpack.c.b16 %v1145, %v1144
    %1162 = vmatprep.subr.bf16.mxu0 0
    %1163 = vmatpush1.bf16.msra.mxu0 %v1153
    %1164 = vmatprep.subr.bf16.mxu0 0
    %1165 = vmatpush1.bf16.msra.mxu0 %v1152
    %1166 = vmatprep.subr.bf16.mxu0 0
    %1167 = vmatpush1.bf16.msra.mxu0 %v1151
    %1168 = vmatprep.subr.bf16.mxu0 0
    %1169 = vmatpush1.bf16.msra.mxu0 %v1150
    %1170 = vmatprep.subr.bf16.mxu0 0
    %1171 = vmatpush1.bf16.msra.mxu0 %v1149
    %1172 = vmatprep.subr.bf16.mxu0 0
    %1173 = vmatpush1.bf16.msra.mxu0 %v1148
    %1174 = vmatprep.subr.bf16.mxu0 0
    %1175 = vmatpush1.bf16.msra.mxu0 %v1147
    %1176 = vmatprep.subr.bf16.mxu0 0
    %1177 = vmatpush1.bf16.msra.mxu0 %v1146
    %1178 = vmatprep.subr.bf16.mxu0 0
    %1179 = vmatpush2.bf16.msra.mxu0 0
    %1180 = vmatprep.subr.bf16.mxu0 0
    %1181 = vmatpush2.bf16.msra.mxu0 0
    %1182 = vmatprep.subr.bf16.mxu0 0
    %1183 = vmatpush2.bf16.msra.mxu0 0
    %1184 = vmatprep.subr.bf16.mxu0 0
    %1185 = vmatpush2.bf16.msra.mxu0 0
    %1186 = vmatprep.subr.bf16.mxu0 0
    %1187 = vmatpush2.bf16.msra.mxu0 0
    %1188 = vmatprep.subr.bf16.mxu0 0
    %1189 = vmatpush2.bf16.msra.mxu0 0
    %1190 = vmatprep.subr.bf16.mxu0 0
    %1191 = vmatpush2.bf16.msra.mxu0 0
    %1192 = vmatprep.subr.bf16.mxu0 0
    %1193 = vmatpush2.bf16.msra.mxu0 0
    %1194 = vmatprep.mubr.bf16.mxu0 0
    %1195 = vmatmul.mubr.bf16.gmra.mxu0 %v971
    %v1196 = vpop.f32.mrf.mxu0
    %v1197 = vadd.f32 %v1112, %v1196
    %v1198 = vpop.f32.mrf.mxu0
    %v1199 = vpop.f32.mrf.mxu0
    %v1200 = vpop.f32.mrf.mxu0
    %1201 = vdwg.mxu0
    %v1202 = vsel %vm1084, %v1197, -inf
    %1203 = vmax.xlane.f32.xlu0 %v1202
    %v1204 = vpop.xlane.xlu0 %1203
    %v1205 = vsub.f32 %v1197, %v1204
    %v1206 = vmul.f32 %v1205, 1.442695
    %v1207 = vpow.pop %v1206
    %v1208 = vsel %vm1084, %v1207, 0.0
    %1209 = vadd.xlane.f32.xlu0 %v1208
    %v1210 = vpop.xlane.xlu0 %1209
    %v1211 = vrcp.pop %v1210
    %v1212 = vmul.f32 %v1207, %v1211
    %1213 = vst [vmem:[#allocation8] sm:$0x3] %v1090
    %1214 = vst [vmem:[#allocation9] sm:$0x3] %v1212
    %v1215 = vld [vmem:[%s1] sm:$0xff]
    %v1216 = vld [vmem:[%s1 + $0x8] sm:$0xff]
    %v1219 = vcombine.high %v1215, %v1215
    %v1221 = vunpack.c.l.s4 1983009808
    %v1222 = vunpack.c.0.s8 %v1221
    %v1223 = vlaneseq
    %v1224 = vshrl.u32 %v1223, 7
    %v1225 = vsub.s32 %v1222, %v1224
    %v1226 = vrot.slane %v1215, %v1225
    %v1228 = vunpack.c.l.s4 1983009808
    %v1229 = vunpack.c.0.s8 %v1228
    %v1230 = vlaneseq
    %v1231 = vshrl.u32 %v1230, 7
    %v1232 = vsub.s32 %v1229, %v1231
    %v1233 = vrot.slane %v1219, %v1232
    %v1234 = vcombine.high %v1226, %v1226
    %v1235 = vcombine.high %v1233, %v1233
    %v1236 = vcombine.high %v1216, %v1216
    %v1238 = vunpack.c.l.s4 1983009808
    %v1239 = vunpack.c.0.s8 %v1238
    %v1240 = vlaneseq
    %v1241 = vshrl.u32 %v1240, 7
    %v1242 = vsub.s32 %v1239, %v1241
    %v1243 = vrot.slane %v1216, %v1242
    %v1245 = vunpack.c.l.s4 1983009808
    %v1246 = vunpack.c.0.s8 %v1245
    %v1247 = vlaneseq
    %v1248 = vshrl.u32 %v1247, 7
    %v1249 = vsub.s32 %v1246, %v1248
    %v1250 = vrot.slane %v1236, %v1249
    %v1251 = vcombine.high %v1243, %v1243
    %v1252 = vcombine.high %v1250, %v1250
    %v1261 = vpack.c.bf16 %v1226, %v1226
    %v1262 = vpack.c.bf16 %v1234, %v1234
    %v1263 = vpack.c.bf16 %v1233, %v1233
    %v1264 = vpack.c.bf16 %v1235, %v1235
    %v1265 = vpack.c.bf16 %v1243, %v1243
    %v1266 = vpack.c.bf16 %v1251, %v1251
    %v1267 = vpack.c.bf16 %v1250, %v1250
    %v1268 = vpack.c.bf16 %v1252, %v1252
    %v1269 = vld [vmem:[#allocation2] sm:$0xf]
    %v1270 = vld [vmem:[#allocation2 + $0x4] sm:$0xf]
    %v1271 = vld [vmem:[#allocation2 + $0x8] sm:$0xf]
    %v1272 = vld [vmem:[#allocation2 + $0xc] sm:$0xf]
    %v1273 = vld [vmem:[#allocation2 + $0x10] sm:$0xf]
    %v1274 = vld [vmem:[#allocation2 + $0x14] sm:$0xf]
    %v1275 = vld [vmem:[#allocation2 + $0x18] sm:$0xf]
    %v1276 = vld [vmem:[#allocation2 + $0x1c] sm:$0xf]
    %v1277 = vld [vmem:[#allocation2 + $0x20] sm:$0xf]
    %v1278 = vld [vmem:[#allocation2 + $0x24] sm:$0xf]
    %v1279 = vld [vmem:[#allocation2 + $0x28] sm:$0xf]
    %v1280 = vld [vmem:[#allocation2 + $0x2c] sm:$0xf]
    %v1281 = vld [vmem:[#allocation2 + $0x30] sm:$0xf]
    %v1282 = vld [vmem:[#allocation2 + $0x34] sm:$0xf]
    %v1283 = vld [vmem:[#allocation2 + $0x38] sm:$0xf]
    %v1284 = vld [vmem:[#allocation2 + $0x3c] sm:$0xf]
    %v1285 = vld [vmem:[#allocation2 + $0x40] sm:$0xf]
    %v1286 = vld [vmem:[#allocation2 + $0x44] sm:$0xf]
    %v1287 = vld [vmem:[#allocation2 + $0x48] sm:$0xf]
    %v1288 = vld [vmem:[#allocation2 + $0x4c] sm:$0xf]
    %v1289 = vld [vmem:[#allocation2 + $0x50] sm:$0xf]
    %v1290 = vld [vmem:[#allocation2 + $0x54] sm:$0xf]
    %v1291 = vld [vmem:[#allocation2 + $0x58] sm:$0xf]
    %v1292 = vld [vmem:[#allocation2 + $0x5c] sm:$0xf]
    %v1293 = vld [vmem:[#allocation2 + $0x60] sm:$0xf]
    %v1294 = vld [vmem:[#allocation2 + $0x64] sm:$0xf]
    %v1295 = vld [vmem:[#allocation2 + $0x68] sm:$0xf]
    %v1296 = vld [vmem:[#allocation2 + $0x6c] sm:$0xf]
    %v1297 = vld [vmem:[#allocation2 + $0x70] sm:$0xf]
    %v1298 = vld [vmem:[#allocation2 + $0x74] sm:$0xf]
    %v1299 = vld [vmem:[#allocation2 + $0x78] sm:$0xf]
    %v1300 = vld [vmem:[#allocation2 + $0x7c] sm:$0xf]
    %v1301 = vld [vmem:[#allocation2 + $0x80] sm:$0xf]
    %v1302 = vld [vmem:[#allocation2 + $0x84] sm:$0xf]
    %v1303 = vld [vmem:[#allocation2 + $0x88] sm:$0xf]
    %v1304 = vld [vmem:[#allocation2 + $0x8c] sm:$0xf]
    %v1305 = vld [vmem:[#allocation2 + $0x90] sm:$0xf]
    %v1306 = vld [vmem:[#allocation2 + $0x94] sm:$0xf]
    %v1307 = vld [vmem:[#allocation2 + $0x98] sm:$0xf]
    %v1308 = vld [vmem:[#allocation2 + $0x9c] sm:$0xf]
    %v1309 = vld [vmem:[#allocation2 + $0xa0] sm:$0xf]
    %v1310 = vld [vmem:[#allocation2 + $0xa4] sm:$0xf]
    %v1311 = vld [vmem:[#allocation2 + $0xa8] sm:$0xf]
    %v1312 = vld [vmem:[#allocation2 + $0xac] sm:$0xf]
    %v1313 = vld [vmem:[#allocation2 + $0xb0] sm:$0xf]
    %v1314 = vld [vmem:[#allocation2 + $0xb4] sm:$0xf]
    %v1315 = vld [vmem:[#allocation2 + $0xb8] sm:$0xf]
    %v1316 = vld [vmem:[#allocation2 + $0xbc] sm:$0xf]
    %v1317 = vld [vmem:[#allocation2 + $0xc0] sm:$0xf]
    %v1318 = vld [vmem:[#allocation2 + $0xc4] sm:$0xf]
    %v1319 = vld [vmem:[#allocation2 + $0xc8] sm:$0xf]
    %v1320 = vld [vmem:[#allocation2 + $0xcc] sm:$0xf]
    %v1321 = vld [vmem:[#allocation2 + $0xd0] sm:$0xf]
    %v1322 = vld [vmem:[#allocation2 + $0xd4] sm:$0xf]
    %v1323 = vld [vmem:[#allocation2 + $0xd8] sm:$0xf]
    %v1324 = vld [vmem:[#allocation2 + $0xdc] sm:$0xf]
    %v1325 = vld [vmem:[#allocation2 + $0xe0] sm:$0xf]
    %v1326 = vld [vmem:[#allocation2 + $0xe4] sm:$0xf]
    %v1327 = vld [vmem:[#allocation2 + $0xe8] sm:$0xf]
    %v1328 = vld [vmem:[#allocation2 + $0xec] sm:$0xf]
    %v1329 = vld [vmem:[#allocation2 + $0xf0] sm:$0xf]
    %v1330 = vld [vmem:[#allocation2 + $0xf4] sm:$0xf]
    %v1331 = vld [vmem:[#allocation2 + $0xf8] sm:$0xf]
    %v1332 = vld [vmem:[#allocation2 + $0xfc] sm:$0xf]
    %v1333 = vld [vmem:[#allocation2 + $0x100] sm:$0xf]
    %v1334 = vld [vmem:[#allocation2 + $0x104] sm:$0xf]
    %v1335 = vld [vmem:[#allocation2 + $0x108] sm:$0xf]
    %v1336 = vld [vmem:[#allocation2 + $0x10c] sm:$0xf]
    %v1337 = vld [vmem:[#allocation2 + $0x110] sm:$0xf]
    %v1338 = vld [vmem:[#allocation2 + $0x114] sm:$0xf]
    %v1339 = vld [vmem:[#allocation2 + $0x118] sm:$0xf]
    %v1340 = vld [vmem:[#allocation2 + $0x11c] sm:$0xf]
    %v1341 = vld [vmem:[#allocation2 + $0x120] sm:$0xf]
    %v1342 = vld [vmem:[#allocation2 + $0x124] sm:$0xf]
    %v1343 = vld [vmem:[#allocation2 + $0x128] sm:$0xf]
    %v1344 = vld [vmem:[#allocation2 + $0x12c] sm:$0xf]
    %v1345 = vld [vmem:[#allocation2 + $0x130] sm:$0xf]
    %v1346 = vld [vmem:[#allocation2 + $0x134] sm:$0xf]
    %v1347 = vld [vmem:[#allocation2 + $0x138] sm:$0xf]
    %v1348 = vld [vmem:[#allocation2 + $0x13c] sm:$0xf]
    %v1349 = vld [vmem:[#allocation2 + $0x140] sm:$0xf]
    %v1350 = vld [vmem:[#allocation2 + $0x144] sm:$0xf]
    %v1351 = vld [vmem:[#allocation2 + $0x148] sm:$0xf]
    %v1352 = vld [vmem:[#allocation2 + $0x14c] sm:$0xf]
    %v1353 = vld [vmem:[#allocation2 + $0x150] sm:$0xf]
    %v1354 = vld [vmem:[#allocation2 + $0x154] sm:$0xf]
    %v1355 = vld [vmem:[#allocation2 + $0x158] sm:$0xf]
    %v1356 = vld [vmem:[#allocation2 + $0x15c] sm:$0xf]
    %v1357 = vld [vmem:[#allocation2 + $0x160] sm:$0xf]
    %v1358 = vld [vmem:[#allocation2 + $0x164] sm:$0xf]
    %v1359 = vld [vmem:[#allocation2 + $0x168] sm:$0xf]
    %v1360 = vld [vmem:[#allocation2 + $0x16c] sm:$0xf]
    %v1361 = vld [vmem:[#allocation2 + $0x170] sm:$0xf]
    %v1362 = vld [vmem:[#allocation2 + $0x174] sm:$0xf]
    %v1363 = vld [vmem:[#allocation2 + $0x178] sm:$0xf]
    %v1364 = vld [vmem:[#allocation2 + $0x17c] sm:$0xf]
    %v1365 = vld [vmem:[#allocation2 + $0x180] sm:$0xf]
    %v1366 = vld [vmem:[#allocation2 + $0x184] sm:$0xf]
    %v1367 = vld [vmem:[#allocation2 + $0x188] sm:$0xf]
    %v1368 = vld [vmem:[#allocation2 + $0x18c] sm:$0xf]
    %v1369 = vld [vmem:[#allocation2 + $0x190] sm:$0xf]
    %v1370 = vld [vmem:[#allocation2 + $0x194] sm:$0xf]
    %v1371 = vld [vmem:[#allocation2 + $0x198] sm:$0xf]
    %v1372 = vld [vmem:[#allocation2 + $0x19c] sm:$0xf]
    %v1373 = vld [vmem:[#allocation2 + $0x1a0] sm:$0xf]
    %v1374 = vld [vmem:[#allocation2 + $0x1a4] sm:$0xf]
    %v1375 = vld [vmem:[#allocation2 + $0x1a8] sm:$0xf]
    %v1376 = vld [vmem:[#allocation2 + $0x1ac] sm:$0xf]
    %v1377 = vld [vmem:[#allocation2 + $0x1b0] sm:$0xf]
    %v1378 = vld [vmem:[#allocation2 + $0x1b4] sm:$0xf]
    %v1379 = vld [vmem:[#allocation2 + $0x1b8] sm:$0xf]
    %v1380 = vld [vmem:[#allocation2 + $0x1bc] sm:$0xf]
    %v1381 = vld [vmem:[#allocation2 + $0x1c0] sm:$0xf]
    %v1382 = vld [vmem:[#allocation2 + $0x1c4] sm:$0xf]
    %v1383 = vld [vmem:[#allocation2 + $0x1c8] sm:$0xf]
    %v1384 = vld [vmem:[#allocation2 + $0x1cc] sm:$0xf]
    %v1385 = vld [vmem:[#allocation2 + $0x1d0] sm:$0xf]
    %v1386 = vld [vmem:[#allocation2 + $0x1d4] sm:$0xf]
    %v1387 = vld [vmem:[#allocation2 + $0x1d8] sm:$0xf]
    %v1388 = vld [vmem:[#allocation2 + $0x1dc] sm:$0xf]
    %v1389 = vld [vmem:[#allocation2 + $0x1e0] sm:$0xf]
    %v1390 = vld [vmem:[#allocation2 + $0x1e4] sm:$0xf]
    %v1391 = vld [vmem:[#allocation2 + $0x1e8] sm:$0xf]
    %v1392 = vld [vmem:[#allocation2 + $0x1ec] sm:$0xf]
    %v1393 = vld [vmem:[#allocation2 + $0x1f0] sm:$0xf]
    %v1394 = vld [vmem:[#allocation2 + $0x1f4] sm:$0xf]
    %v1395 = vld [vmem:[#allocation2 + $0x1f8] sm:$0xf]
    %v1396 = vld [vmem:[#allocation2 + $0x1fc] sm:$0xf]
    %v1397 = vld [vmem:[%s3] sm:$0x1]
    %v1399 = vlaneseq
    %v1400 = vshrl.u32 %v1399, 7
    %v1401 = vsub.s32 0, %v1400
    %v1402 = vrot.slane %v1397, %v1401
    %v1532 = vunpack.c.l.b16 %v1269
    %v1533 = vunpack.c.l.b16 %v1270
    %v1534 = vunpack.c.l.b16 %v1271
    %v1535 = vunpack.c.l.b16 %v1272
    %v1536 = vunpack.c.l.b16 %v1273
    %v1537 = vunpack.c.l.b16 %v1274
    %v1538 = vunpack.c.l.b16 %v1275
    %v1539 = vunpack.c.l.b16 %v1276
    %v1540 = vunpack.c.l.b16 %v1277
    %v1541 = vunpack.c.l.b16 %v1278
    %v1542 = vunpack.c.l.b16 %v1279
    %v1543 = vunpack.c.l.b16 %v1280
    %v1544 = vunpack.c.l.b16 %v1281
    %v1545 = vunpack.c.l.b16 %v1282
    %v1546 = vunpack.c.l.b16 %v1283
    %v1547 = vunpack.c.l.b16 %v1284
    %v1548 = vunpack.c.l.b16 %v1285
    %v1549 = vunpack.c.l.b16 %v1286
    %v1550 = vunpack.c.l.b16 %v1287
    %v1551 = vunpack.c.l.b16 %v1288
    %v1552 = vunpack.c.l.b16 %v1289
    %v1553 = vunpack.c.l.b16 %v1290
    %v1554 = vunpack.c.l.b16 %v1291
    %v1555 = vunpack.c.l.b16 %v1292
    %v1556 = vunpack.c.l.b16 %v1293
    %v1557 = vunpack.c.l.b16 %v1294
    %v1558 = vunpack.c.l.b16 %v1295
    %v1559 = vunpack.c.l.b16 %v1296
    %v1560 = vunpack.c.l.b16 %v1297
    %v1561 = vunpack.c.l.b16 %v1298
    %v1562 = vunpack.c.l.b16 %v1299
    %v1563 = vunpack.c.l.b16 %v1300
    %v1564 = vunpack.c.l.b16 %v1301
    %v1565 = vunpack.c.l.b16 %v1302
    %v1566 = vunpack.c.l.b16 %v1303
    %v1567 = vunpack.c.l.b16 %v1304
    %v1568 = vunpack.c.l.b16 %v1305
    %v1569 = vunpack.c.l.b16 %v1306
    %v1570 = vunpack.c.l.b16 %v1307
    %v1571 = vunpack.c.l.b16 %v1308
    %v1572 = vunpack.c.l.b16 %v1309
    %v1573 = vunpack.c.l.b16 %v1310
    %v1574 = vunpack.c.l.b16 %v1311
    %v1575 = vunpack.c.l.b16 %v1312
    %v1576 = vunpack.c.l.b16 %v1313
    %v1577 = vunpack.c.l.b16 %v1314
    %v1578 = vunpack.c.l.b16 %v1315
    %v1579 = vunpack.c.l.b16 %v1316
    %v1580 = vunpack.c.l.b16 %v1317
    %v1581 = vunpack.c.l.b16 %v1318
    %v1582 = vunpack.c.l.b16 %v1319
    %v1583 = vunpack.c.l.b16 %v1320
    %v1584 = vunpack.c.l.b16 %v1321
    %v1585 = vunpack.c.l.b16 %v1322
    %v1586 = vunpack.c.l.b16 %v1323
    %v1587 = vunpack.c.l.b16 %v1324
    %v1588 = vunpack.c.l.b16 %v1325
    %v1589 = vunpack.c.l.b16 %v1326
    %v1590 = vunpack.c.l.b16 %v1327
    %v1591 = vunpack.c.l.b16 %v1328
    %v1592 = vunpack.c.l.b16 %v1329
    %v1593 = vunpack.c.l.b16 %v1330
    %v1594 = vunpack.c.l.b16 %v1331
    %v1595 = vunpack.c.l.b16 %v1332
    %v1596 = vunpack.c.l.b16 %v1333
    %v1597 = vunpack.c.l.b16 %v1334
    %v1598 = vunpack.c.l.b16 %v1335
    %v1599 = vunpack.c.l.b16 %v1336
    %v1600 = vunpack.c.l.b16 %v1337
    %v1601 = vunpack.c.l.b16 %v1338
    %v1602 = vunpack.c.l.b16 %v1339
    %v1603 = vunpack.c.l.b16 %v1340
    %v1604 = vunpack.c.l.b16 %v1341
    %v1605 = vunpack.c.l.b16 %v1342
    %v1606 = vunpack.c.l.b16 %v1343
    %v1607 = vunpack.c.l.b16 %v1344
    %v1608 = vunpack.c.l.b16 %v1345
    %v1609 = vunpack.c.l.b16 %v1346
    %v1610 = vunpack.c.l.b16 %v1347
    %v1611 = vunpack.c.l.b16 %v1348
    %v1612 = vunpack.c.l.b16 %v1349
    %v1613 = vunpack.c.l.b16 %v1350
    %v1614 = vunpack.c.l.b16 %v1351
    %v1615 = vunpack.c.l.b16 %v1352
    %v1616 = vunpack.c.l.b16 %v1353
    %v1617 = vunpack.c.l.b16 %v1354
    %v1618 = vunpack.c.l.b16 %v1355
    %v1619 = vunpack.c.l.b16 %v1356
    %v1620 = vunpack.c.l.b16 %v1357
    %v1621 = vunpack.c.l.b16 %v1358
    %v1622 = vunpack.c.l.b16 %v1359
    %v1623 = vunpack.c.l.b16 %v1360
    %v1624 = vunpack.c.l.b16 %v1361
    %v1625 = vunpack.c.l.b16 %v1362
    %v1626 = vunpack.c.l.b16 %v1363
    %v1627 = vunpack.c.l.b16 %v1364
    %v1628 = vunpack.c.l.b16 %v1365
    %v1629 = vunpack.c.l.b16 %v1366
    %v1630 = vunpack.c.l.b16 %v1367
    %v1631 = vunpack.c.l.b16 %v1368
    %v1632 = vunpack.c.l.b16 %v1369
    %v1633 = vunpack.c.l.b16 %v1370
    %v1634 = vunpack.c.l.b16 %v1371
    %v1635 = vunpack.c.l.b16 %v1372
    %v1636 = vunpack.c.l.b16 %v1373
    %v1637 = vunpack.c.l.b16 %v1374
    %v1638 = vunpack.c.l.b16 %v1375
    %v1639 = vunpack.c.l.b16 %v1376
    %v1640 = vunpack.c.l.b16 %v1377
    %v1641 = vunpack.c.l.b16 %v1378
    %v1642 = vunpack.c.l.b16 %v1379
    %v1643 = vunpack.c.l.b16 %v1380
    %v1644 = vunpack.c.l.b16 %v1381
    %v1645 = vunpack.c.l.b16 %v1382
    %v1646 = vunpack.c.l.b16 %v1383
    %v1647 = vunpack.c.l.b16 %v1384
    %v1648 = vunpack.c.l.b16 %v1385
    %v1649 = vunpack.c.l.b16 %v1386
    %v1650 = vunpack.c.l.b16 %v1387
    %v1651 = vunpack.c.l.b16 %v1388
    %v1652 = vunpack.c.l.b16 %v1389
    %v1653 = vunpack.c.l.b16 %v1390
    %v1654 = vunpack.c.l.b16 %v1391
    %v1655 = vunpack.c.l.b16 %v1392
    %v1656 = vunpack.c.l.b16 %v1393
    %v1657 = vunpack.c.l.b16 %v1394
    %v1658 = vunpack.c.l.b16 %v1395
    %v1659 = vunpack.c.l.b16 %v1396
    %v1660 = vpack.c.b16 %v1533, %v1532
    %v1661 = vpack.c.b16 %v1535, %v1534
    %v1662 = vpack.c.b16 %v1537, %v1536
    %v1663 = vpack.c.b16 %v1539, %v1538
    %v1664 = vpack.c.b16 %v1541, %v1540
    %v1665 = vpack.c.b16 %v1543, %v1542
    %v1666 = vpack.c.b16 %v1545, %v1544
    %v1667 = vpack.c.b16 %v1547, %v1546
    %v1668 = vpack.c.b16 %v1549, %v1548
    %v1669 = vpack.c.b16 %v1551, %v1550
    %v1670 = vpack.c.b16 %v1553, %v1552
    %v1671 = vpack.c.b16 %v1555, %v1554
    %v1672 = vpack.c.b16 %v1557, %v1556
    %v1673 = vpack.c.b16 %v1559, %v1558
    %v1674 = vpack.c.b16 %v1561, %v1560
    %v1675 = vpack.c.b16 %v1563, %v1562
    %v1676 = vpack.c.b16 %v1565, %v1564
    %v1677 = vpack.c.b16 %v1567, %v1566
    %v1678 = vpack.c.b16 %v1569, %v1568
    %v1679 = vpack.c.b16 %v1571, %v1570
    %v1680 = vpack.c.b16 %v1573, %v1572
    %v1681 = vpack.c.b16 %v1575, %v1574
    %v1682 = vpack.c.b16 %v1577, %v1576
    %v1683 = vpack.c.b16 %v1579, %v1578
    %v1684 = vpack.c.b16 %v1581, %v1580
    %v1685 = vpack.c.b16 %v1583, %v1582
    %v1686 = vpack.c.b16 %v1585, %v1584
    %v1687 = vpack.c.b16 %v1587, %v1586
    %v1688 = vpack.c.b16 %v1589, %v1588
    %v1689 = vpack.c.b16 %v1591, %v1590
    %v1690 = vpack.c.b16 %v1593, %v1592
    %v1691 = vpack.c.b16 %v1595, %v1594
    %v1692 = vpack.c.b16 %v1597, %v1596
    %v1693 = vpack.c.b16 %v1599, %v1598
    %v1694 = vpack.c.b16 %v1601, %v1600
    %v1695 = vpack.c.b16 %v1603, %v1602
    %v1696 = vpack.c.b16 %v1605, %v1604
    %v1697 = vpack.c.b16 %v1607, %v1606
    %v1698 = vpack.c.b16 %v1609, %v1608
    %v1699 = vpack.c.b16 %v1611, %v1610
    %v1700 = vpack.c.b16 %v1613, %v1612
    %v1701 = vpack.c.b16 %v1615, %v1614
    %v1702 = vpack.c.b16 %v1617, %v1616
    %v1703 = vpack.c.b16 %v1619, %v1618
    %v1704 = vpack.c.b16 %v1621, %v1620
    %v1705 = vpack.c.b16 %v1623, %v1622
    %v1706 = vpack.c.b16 %v1625, %v1624
    %v1707 = vpack.c.b16 %v1627, %v1626
    %v1708 = vpack.c.b16 %v1629, %v1628
    %v1709 = vpack.c.b16 %v1631, %v1630
    %v1710 = vpack.c.b16 %v1633, %v1632
    %v1711 = vpack.c.b16 %v1635, %v1634
    %v1712 = vpack.c.b16 %v1637, %v1636
    %v1713 = vpack.c.b16 %v1639, %v1638
    %v1714 = vpack.c.b16 %v1641, %v1640
    %v1715 = vpack.c.b16 %v1643, %v1642
    %v1716 = vpack.c.b16 %v1645, %v1644
    %v1717 = vpack.c.b16 %v1647, %v1646
    %v1718 = vpack.c.b16 %v1649, %v1648
    %v1719 = vpack.c.b16 %v1651, %v1650
    %v1720 = vpack.c.b16 %v1653, %v1652
    %v1721 = vpack.c.b16 %v1655, %v1654
    %v1722 = vpack.c.b16 %v1657, %v1656
    %v1723 = vpack.c.b16 %v1659, %v1658
    %1788 = vmatprep.subr.bf16.mxu0 0
    %1789 = vmatpush1.bf16.msra.mxu0 %v1667
    %1790 = vmatprep.subr.bf16.mxu0 0
    %1791 = vmatpush1.bf16.msra.mxu0 %v1666
    %1792 = vmatprep.subr.bf16.mxu0 0
    %1793 = vmatpush1.bf16.msra.mxu0 %v1665
    %1794 = vmatprep.subr.bf16.mxu0 0
    %1795 = vmatpush1.bf16.msra.mxu0 %v1664
    %1796 = vmatprep.subr.bf16.mxu0 0
    %1797 = vmatpush1.bf16.msra.mxu0 %v1663
    %1798 = vmatprep.subr.bf16.mxu0 0
    %1799 = vmatpush1.bf16.msra.mxu0 %v1662
    %1800 = vmatprep.subr.bf16.mxu0 0
    %1801 = vmatpush1.bf16.msra.mxu0 %v1661
    %1802 = vmatprep.subr.bf16.mxu0 0
    %1803 = vmatpush1.bf16.msra.mxu0 %v1660
    %1804 = vmatprep.subr.bf16.mxu0 0
    %1805 = vmatpush2.bf16.msra.mxu0 %v1675
    %1806 = vmatprep.subr.bf16.mxu0 0
    %1807 = vmatpush2.bf16.msra.mxu0 %v1674
    %1808 = vmatprep.subr.bf16.mxu0 0
    %1809 = vmatpush2.bf16.msra.mxu0 %v1673
    %1810 = vmatprep.subr.bf16.mxu0 0
    %1811 = vmatpush2.bf16.msra.mxu0 %v1672
    %1812 = vmatprep.subr.bf16.mxu0 0
    %1813 = vmatpush2.bf16.msra.mxu0 %v1671
    %1814 = vmatprep.subr.bf16.mxu0 0
    %1815 = vmatpush2.bf16.msra.mxu0 %v1670
    %1816 = vmatprep.subr.bf16.mxu0 0
    %1817 = vmatpush2.bf16.msra.mxu0 %v1669
    %1818 = vmatprep.subr.bf16.mxu0 0
    %1819 = vmatpush2.bf16.msra.mxu0 %v1668
    %1820 = vmatprep.mubr.bf16.mxu0 %v1262
    %1821 = vmatmul.mubr.bf16.gmra.mxu0 %v1261
    %v1822 = vpop.f32.mrf.mxu0
    %v1823 = vadd.f32 %v1402, %v1822
    %v1824 = vpop.f32.mrf.mxu0
    %v1825 = vpop.f32.mrf.mxu0
    %v1826 = vpop.f32.mrf.mxu0
    %1827 = vdwg.mxu0
    %1828 = vmatprep.subr.bf16.mxu0 0
    %1829 = vmatpush1.bf16.msra.mxu0 %v1683
    %1830 = vmatprep.subr.bf16.mxu0 0
    %1831 = vmatpush1.bf16.msra.mxu0 %v1682
    %1832 = vmatprep.subr.bf16.mxu0 0
    %1833 = vmatpush1.bf16.msra.mxu0 %v1681
    %1834 = vmatprep.subr.bf16.mxu0 0
    %1835 = vmatpush1.bf16.msra.mxu0 %v1680
    %1836 = vmatprep.subr.bf16.mxu0 0
    %1837 = vmatpush1.bf16.msra.mxu0 %v1679
    %1838 = vmatprep.subr.bf16.mxu0 0
    %1839 = vmatpush1.bf16.msra.mxu0 %v1678
    %1840 = vmatprep.subr.bf16.mxu0 0
    %1841 = vmatpush1.bf16.msra.mxu0 %v1677
    %1842 = vmatprep.subr.bf16.mxu0 0
    %1843 = vmatpush1.bf16.msra.mxu0 %v1676
    %1844 = vmatprep.subr.bf16.mxu0 0
    %1845 = vmatpush2.bf16.msra.mxu0 %v1691
    %1846 = vmatprep.subr.bf16.mxu0 0
    %1847 = vmatpush2.bf16.msra.mxu0 %v1690
    %1848 = vmatprep.subr.bf16.mxu0 0
    %1849 = vmatpush2.bf16.msra.mxu0 %v1689
    %1850 = vmatprep.subr.bf16.mxu0 0
    %1851 = vmatpush2.bf16.msra.mxu0 %v1688
    %1852 = vmatprep.subr.bf16.mxu0 0
    %1853 = vmatpush2.bf16.msra.mxu0 %v1687
    %1854 = vmatprep.subr.bf16.mxu0 0
    %1855 = vmatpush2.bf16.msra.mxu0 %v1686
    %1856 = vmatprep.subr.bf16.mxu0 0
    %1857 = vmatpush2.bf16.msra.mxu0 %v1685
    %1858 = vmatprep.subr.bf16.mxu0 0
    %1859 = vmatpush2.bf16.msra.mxu0 %v1684
    %1860 = vmatprep.mubr.bf16.mxu0 %v1264
    %1861 = vmatmul.mubr.bf16.gmra.mxu0 %v1263
    %v1862 = vpop.f32.mrf.mxu0
    %v1863 = vadd.f32 %v1823, %v1862
    %v1864 = vpop.f32.mrf.mxu0
    %v1865 = vpop.f32.mrf.mxu0
    %v1866 = vpop.f32.mrf.mxu0
    %1867 = vdwg.mxu0
    %1868 = vmatprep.subr.bf16.mxu0 0
    %1869 = vmatpush1.bf16.msra.mxu0 %v1699
    %1870 = vmatprep.subr.bf16.mxu0 0
    %1871 = vmatpush1.bf16.msra.mxu0 %v1698
    %1872 = vmatprep.subr.bf16.mxu0 0
    %1873 = vmatpush1.bf16.msra.mxu0 %v1697
    %1874 = vmatprep.subr.bf16.mxu0 0
    %1875 = vmatpush1.bf16.msra.mxu0 %v1696
    %1876 = vmatprep.subr.bf16.mxu0 0
    %1877 = vmatpush1.bf16.msra.mxu0 %v1695
    %1878 = vmatprep.subr.bf16.mxu0 0
    %1879 = vmatpush1.bf16.msra.mxu0 %v1694
    %1880 = vmatprep.subr.bf16.mxu0 0
    %1881 = vmatpush1.bf16.msra.mxu0 %v1693
    %1882 = vmatprep.subr.bf16.mxu0 0
    %1883 = vmatpush1.bf16.msra.mxu0 %v1692
    %1884 = vmatprep.subr.bf16.mxu0 0
    %1885 = vmatpush2.bf16.msra.mxu0 %v1707
    %1886 = vmatprep.subr.bf16.mxu0 0
    %1887 = vmatpush2.bf16.msra.mxu0 %v1706
    %1888 = vmatprep.subr.bf16.mxu0 0
    %1889 = vmatpush2.bf16.msra.mxu0 %v1705
    %1890 = vmatprep.subr.bf16.mxu0 0
    %1891 = vmatpush2.bf16.msra.mxu0 %v1704
    %1892 = vmatprep.subr.bf16.mxu0 0
    %1893 = vmatpush2.bf16.msra.mxu0 %v1703
    %1894 = vmatprep.subr.bf16.mxu0 0
    %1895 = vmatpush2.bf16.msra.mxu0 %v1702
    %1896 = vmatprep.subr.bf16.mxu0 0
    %1897 = vmatpush2.bf16.msra.mxu0 %v1701
    %1898 = vmatprep.subr.bf16.mxu0 0
    %1899 = vmatpush2.bf16.msra.mxu0 %v1700
    %1900 = vmatprep.mubr.bf16.mxu0 %v1266
    %1901 = vmatmul.mubr.bf16.gmra.mxu0 %v1265
    %v1902 = vpop.f32.mrf.mxu0
    %v1903 = vadd.f32 %v1863, %v1902
    %v1904 = vpop.f32.mrf.mxu0
    %v1905 = vpop.f32.mrf.mxu0
    %v1906 = vpop.f32.mrf.mxu0
    %1907 = vdwg.mxu0
    %1908 = vmatprep.subr.bf16.mxu0 0
    %1909 = vmatpush1.bf16.msra.mxu0 %v1715
    %1910 = vmatprep.subr.bf16.mxu0 0
    %1911 = vmatpush1.bf16.msra.mxu0 %v1714
    %1912 = vmatprep.subr.bf16.mxu0 0
    %1913 = vmatpush1.bf16.msra.mxu0 %v1713
    %1914 = vmatprep.subr.bf16.mxu0 0
    %1915 = vmatpush1.bf16.msra.mxu0 %v1712
    %1916 = vmatprep.subr.bf16.mxu0 0
    %1917 = vmatpush1.bf16.msra.mxu0 %v1711
    %1918 = vmatprep.subr.bf16.mxu0 0
    %1919 = vmatpush1.bf16.msra.mxu0 %v1710
    %1920 = vmatprep.subr.bf16.mxu0 0
    %1921 = vmatpush1.bf16.msra.mxu0 %v1709
    %1922 = vmatprep.subr.bf16.mxu0 0
    %1923 = vmatpush1.bf16.msra.mxu0 %v1708
    %1924 = vmatprep.subr.bf16.mxu0 0
    %1925 = vmatpush2.bf16.msra.mxu0 %v1723
    %1926 = vmatprep.subr.bf16.mxu0 0
    %1927 = vmatpush2.bf16.msra.mxu0 %v1722
    %1928 = vmatprep.subr.bf16.mxu0 0
    %1929 = vmatpush2.bf16.msra.mxu0 %v1721
    %1930 = vmatprep.subr.bf16.mxu0 0
    %1931 = vmatpush2.bf16.msra.mxu0 %v1720
    %1932 = vmatprep.subr.bf16.mxu0 0
    %1933 = vmatpush2.bf16.msra.mxu0 %v1719
    %1934 = vmatprep.subr.bf16.mxu0 0
    %1935 = vmatpush2.bf16.msra.mxu0 %v1718
    %1936 = vmatprep.subr.bf16.mxu0 0
    %1937 = vmatpush2.bf16.msra.mxu0 %v1717
    %1938 = vmatprep.subr.bf16.mxu0 0
    %1939 = vmatpush2.bf16.msra.mxu0 %v1716
    %1940 = vmatprep.mubr.bf16.mxu0 %v1268
    %1941 = vmatmul.mubr.bf16.gmra.mxu0 %v1267
    %v1942 = vpop.f32.mrf.mxu0
    %v1943 = vadd.f32 %v1903, %v1942
    %v1944 = vpop.f32.mrf.mxu0
    %v1945 = vpop.f32.mrf.mxu0
    %v1946 = vpop.f32.mrf.mxu0
    %1947 = vdwg.mxu0
    %v1948 = vmax.f32 %v1943, 0.0
    %v1949 = vpack.c.bf16 %v1948, %v1948
    %v1950 = vld [vmem:[%s4] sm:$0xff]
    %v1951 = vld [vmem:[%s4 + $0x8] sm:$0xff]
    %v1952 = vld [vmem:[%s4 + $0x10] sm:$0xff]
    %v1953 = vld [vmem:[%s4 + $0x18] sm:$0xff]
    %v1954 = vld [vmem:[%s4 + $0x20] sm:$0xff]
    %v1955 = vld [vmem:[%s4 + $0x28] sm:$0xff]
    %v1956 = vld [vmem:[%s4 + $0x30] sm:$0xff]
    %v1957 = vld [vmem:[%s4 + $0x38] sm:$0xff]
    %v1958 = vld [vmem:[%s4 + $0x40] sm:$0xff]
    %v1959 = vld [vmem:[%s4 + $0x48] sm:$0xff]
    %v1960 = vld [vmem:[%s4 + $0x50] sm:$0xff]
    %v1961 = vld [vmem:[%s4 + $0x58] sm:$0xff]
    %v1962 = vld [vmem:[%s4 + $0x60] sm:$0xff]
    %v1963 = vld [vmem:[%s4 + $0x68] sm:$0xff]
    %v1964 = vld [vmem:[%s4 + $0x70] sm:$0xff]
    %v1965 = vld [vmem:[%s4 + $0x78] sm:$0xff]
    %v1966 = vld [vmem:[%s5] sm:$0x3]
    %v1968 = vlaneseq
    %v1969 = vshrl.u32 %v1968, 7
    %v1970 = vsub.s32 0, %v1969
    %v1971 = vrot.slane %v1966, %v1970
    %v1972 = vlaneseq
    %v1973 = vshrl.u32 %v1972, 7
    %v1974 = vsub.s32 1, %v1973
    %v1975 = vrot.slane %v1966, %v1974
    %v1994 = vunpack.c.l.b16 %v1950
    %v1995 = vunpack.c.h.b16 %v1950
    %v1996 = vunpack.c.l.b16 %v1951
    %v1997 = vunpack.c.h.b16 %v1951
    %v1998 = vunpack.c.l.b16 %v1952
    %v1999 = vunpack.c.h.b16 %v1952
    %v2000 = vunpack.c.l.b16 %v1953
    %v2001 = vunpack.c.h.b16 %v1953
    %v2002 = vunpack.c.l.b16 %v1954
    %v2003 = vunpack.c.h.b16 %v1954
    %v2004 = vunpack.c.l.b16 %v1955
    %v2005 = vunpack.c.h.b16 %v1955
    %v2006 = vunpack.c.l.b16 %v1956
    %v2007 = vunpack.c.h.b16 %v1956
    %v2008 = vunpack.c.l.b16 %v1957
    %v2009 = vunpack.c.h.b16 %v1957
    %v2010 = vunpack.c.l.b16 %v1958
    %v2011 = vunpack.c.h.b16 %v1958
    %v2012 = vunpack.c.l.b16 %v1959
    %v2013 = vunpack.c.h.b16 %v1959
    %v2014 = vunpack.c.l.b16 %v1960
    %v2015 = vunpack.c.h.b16 %v1960
    %v2016 = vunpack.c.l.b16 %v1961
    %v2017 = vunpack.c.h.b16 %v1961
    %v2018 = vunpack.c.l.b16 %v1962
    %v2019 = vunpack.c.h.b16 %v1962
    %v2020 = vunpack.c.l.b16 %v1963
    %v2021 = vunpack.c.h.b16 %v1963
    %v2022 = vunpack.c.l.b16 %v1964
    %v2023 = vunpack.c.h.b16 %v1964
    %v2024 = vunpack.c.l.b16 %v1965
    %v2025 = vunpack.c.h.b16 %v1965
    %v2026 = vpack.c.b16 %v1996, %v1994
    %v2027 = vpack.c.b16 %v1997, %v1995
    %v2028 = vpack.c.b16 %v2000, %v1998
    %v2029 = vpack.c.b16 %v2001, %v1999
    %v2030 = vpack.c.b16 %v2004, %v2002
    %v2031 = vpack.c.b16 %v2005, %v2003
    %v2032 = vpack.c.b16 %v2008, %v2006
    %v2033 = vpack.c.b16 %v2009, %v2007
    %v2034 = vpack.c.b16 %v2012, %v2010
    %v2035 = vpack.c.b16 %v2013, %v2011
    %v2036 = vpack.c.b16 %v2016, %v2014
    %v2037 = vpack.c.b16 %v2017, %v2015
    %v2038 = vpack.c.b16 %v2020, %v2018
    %v2039 = vpack.c.b16 %v2021, %v2019
    %v2040 = vpack.c.b16 %v2024, %v2022
    %v2041 = vpack.c.b16 %v2025, %v2023
    %2058 = vmatprep.subr.bf16.mxu0 %v2041
    %2059 = vmatpush1.bf16.msra.mxu0 %v2040
    %2060 = vmatprep.subr.bf16.mxu0 %v2039
    %2061 = vmatpush1.bf16.msra.mxu0 %v2038
    %2062 = vmatprep.subr.bf16.mxu0 %v2037
    %2063 = vmatpush1.bf16.msra.mxu0 %v2036
    %2064 = vmatprep.subr.bf16.mxu0 %v2035
    %2065 = vmatpush1.bf16.msra.mxu0 %v2034
    %2066 = vmatprep.subr.bf16.mxu0 %v2033
    %2067 = vmatpush1.bf16.msra.mxu0 %v2032
    %2068 = vmatprep.subr.bf16.mxu0 %v2031
    %2069 = vmatpush1.bf16.msra.mxu0 %v2030
    %2070 = vmatprep.subr.bf16.mxu0 %v2029
    %2071 = vmatpush1.bf16.msra.mxu0 %v2028
    %2072 = vmatprep.subr.bf16.mxu0 %v2027
    %2073 = vmatpush1.bf16.msra.mxu0 %v2026
    %2074 = vmatprep.subr.bf16.mxu0 0
    %2075 = vmatpush2.bf16.msra.mxu0 0
    %2076 = vmatprep.subr.bf16.mxu0 0
    %2077 = vmatpush2.bf16.msra.mxu0 0
    %2078 = vmatprep.subr.bf16.mxu0 0
    %2079 = vmatpush2.bf16.msra.mxu0 0
    %2080 = vmatprep.subr.bf16.mxu0 0
    %2081 = vmatpush2.bf16.msra.mxu0 0
    %2082 = vmatprep.subr.bf16.mxu0 0
    %2083 = vmatpush2.bf16.msra.mxu0 0
    %2084 = vmatprep.subr.bf16.mxu0 0
    %2085 = vmatpush2.bf16.msra.mxu0 0
    %2086 = vmatprep.subr.bf16.mxu0 0
    %2087 = vmatpush2.bf16.msra.mxu0 0
    %2088 = vmatprep.subr.bf16.mxu0 0
    %2089 = vmatpush2.bf16.msra.mxu0 0
    %2090 = vmatprep.mubr.bf16.mxu0 0
    %2091 = vmatmul.mubr.bf16.gmra.mxu0 %v1949
    %v2092 = vpop.f32.mrf.mxu0
    %v2093 = vadd.f32 %v1971, %v2092
    %v2094 = vpop.f32.mrf.mxu0
    %v2095 = vadd.f32 %v1975, %v2094
    %v2096 = vpop.f32.mrf.mxu0
    %v2097 = vpop.f32.mrf.mxu0
    %2098 = vdwg.mxu0
    %v2099 = vmax.f32 %v2093, 0.0
    %v2100 = vmax.f32 %v2095, 0.0
    %v2101 = vpack.c.bf16 %v2099, %v2099
    %v2102 = vpack.c.bf16 %v2100, %v2100
    %v2103 = vld [vmem:[#allocation5] sm:$0xf]
    %v2104 = vld [vmem:[#allocation5 + $0x4] sm:$0xf]
    %v2105 = vld [vmem:[#allocation5 + $0x8] sm:$0xf]
    %v2106 = vld [vmem:[#allocation5 + $0xc] sm:$0xf]
    %v2107 = vld [vmem:[#allocation5 + $0x10] sm:$0xf]
    %v2108 = vld [vmem:[#allocation5 + $0x14] sm:$0xf]
    %v2109 = vld [vmem:[#allocation5 + $0x18] sm:$0xf]
    %v2110 = vld [vmem:[#allocation5 + $0x1c] sm:$0xf]
    %v2111 = vld [vmem:[#allocation5 + $0x20] sm:$0xf]
    %v2112 = vld [vmem:[#allocation5 + $0x24] sm:$0xf]
    %v2113 = vld [vmem:[#allocation5 + $0x28] sm:$0xf]
    %v2114 = vld [vmem:[#allocation5 + $0x2c] sm:$0xf]
    %v2115 = vld [vmem:[#allocation5 + $0x30] sm:$0xf]
    %v2116 = vld [vmem:[#allocation5 + $0x34] sm:$0xf]
    %v2117 = vld [vmem:[#allocation5 + $0x38] sm:$0xf]
    %v2118 = vld [vmem:[#allocation5 + $0x3c] sm:$0xf]
    %v2119 = vld [vmem:[%s7] sm:$0x1]
    %v2121 = vlaneseq
    %v2122 = vshrl.u32 %v2121, 7
    %v2123 = vsub.s32 0, %v2122
    %v2124 = vrot.slane %v2119, %v2123
    %v2142 = vunpack.c.l.b16 %v2103
    %v2143 = vunpack.c.l.b16 %v2104
    %v2144 = vunpack.c.l.b16 %v2105
    %v2145 = vunpack.c.l.b16 %v2106
    %v2146 = vunpack.c.l.b16 %v2107
    %v2147 = vunpack.c.l.b16 %v2108
    %v2148 = vunpack.c.l.b16 %v2109
    %v2149 = vunpack.c.l.b16 %v2110
    %v2150 = vunpack.c.l.b16 %v2111
    %v2151 = vunpack.c.l.b16 %v2112
    %v2152 = vunpack.c.l.b16 %v2113
    %v2153 = vunpack.c.l.b16 %v2114
    %v2154 = vunpack.c.l.b16 %v2115
    %v2155 = vunpack.c.l.b16 %v2116
    %v2156 = vunpack.c.l.b16 %v2117
    %v2157 = vunpack.c.l.b16 %v2118
    %v2158 = vpack.c.b16 %v2143, %v2142
    %v2159 = vpack.c.b16 %v2145, %v2144
    %v2160 = vpack.c.b16 %v2147, %v2146
    %v2161 = vpack.c.b16 %v2149, %v2148
    %v2162 = vpack.c.b16 %v2151, %v2150
    %v2163 = vpack.c.b16 %v2153, %v2152
    %v2164 = vpack.c.b16 %v2155, %v2154
    %v2165 = vpack.c.b16 %v2157, %v2156
    %2174 = vmatprep.subr.bf16.mxu0 0
    %2175 = vmatpush1.bf16.msra.mxu0 %v2165
    %2176 = vmatprep.subr.bf16.mxu0 0
    %2177 = vmatpush1.bf16.msra.mxu0 %v2164
    %2178 = vmatprep.subr.bf16.mxu0 0
    %2179 = vmatpush1.bf16.msra.mxu0 %v2163
    %2180 = vmatprep.subr.bf16.mxu0 0
    %2181 = vmatpush1.bf16.msra.mxu0 %v2162
    %2182 = vmatprep.subr.bf16.mxu0 0
    %2183 = vmatpush1.bf16.msra.mxu0 %v2161
    %2184 = vmatprep.subr.bf16.mxu0 0
    %2185 = vmatpush1.bf16.msra.mxu0 %v2160
    %2186 = vmatprep.subr.bf16.mxu0 0
    %2187 = vmatpush1.bf16.msra.mxu0 %v2159
    %2188 = vmatprep.subr.bf16.mxu0 0
    %2189 = vmatpush1.bf16.msra.mxu0 %v2158
    %2190 = vmatprep.subr.bf16.mxu0 0
    %2191 = vmatpush2.bf16.msra.mxu0 0
    %2192 = vmatprep.subr.bf16.mxu0 0
    %2193 = vmatpush2.bf16.msra.mxu0 0
    %2194 = vmatprep.subr.bf16.mxu0 0
    %2195 = vmatpush2.bf16.msra.mxu0 0
    %2196 = vmatprep.subr.bf16.mxu0 0
    %2197 = vmatpush2.bf16.msra.mxu0 0
    %2198 = vmatprep.subr.bf16.mxu0 0
    %2199 = vmatpush2.bf16.msra.mxu0 0
    %2200 = vmatprep.subr.bf16.mxu0 0
    %2201 = vmatpush2.bf16.msra.mxu0 0
    %2202 = vmatprep.subr.bf16.mxu0 0
    %2203 = vmatpush2.bf16.msra.mxu0 0
    %2204 = vmatprep.subr.bf16.mxu0 0
    %2205 = vmatpush2.bf16.msra.mxu0 0
    %2206 = vmatprep.mubr.bf16.mxu0 0
    %2207 = vmatmul.mubr.bf16.gmra.mxu0 %v2101
    %v2208 = vpop.f32.mrf.mxu0
    %v2209 = vadd.f32 %v2124, %v2208
    %v2210 = vpop.f32.mrf.mxu0
    %v2211 = vpop.f32.mrf.mxu0
    %v2212 = vpop.f32.mrf.mxu0
    %2213 = vdwg.mxu0
    %v2214 = vmul.f32 %v2209, %v2209
    %v2215 = vsel %vm1084, %v2214, 0.0
    %2216 = vadd.xlane.f32.xlu0 %v2215
    %v2217 = vpop.xlane.xlu0 %2216
    %v2218 = vmax.f32 %v2217, 1e-24
    %v2219 = vrsqrt.pop %v2218
    %v2220 = vmul.f32 %v2209, %v2219
    %v2221 = vld [vmem:[#allocation7] sm:$0xf]
    %v2222 = vld [vmem:[#allocation7 + $0x4] sm:$0xf]
    %v2223 = vld [vmem:[#allocation7 + $0x8] sm:$0xf]
    %v2224 = vld [vmem:[#allocation7 + $0xc] sm:$0xf]
    %v2225 = vld [vmem:[#allocation7 + $0x10] sm:$0xf]
    %v2226 = vld [vmem:[#allocation7 + $0x14] sm:$0xf]
    %v2227 = vld [vmem:[#allocation7 + $0x18] sm:$0xf]
    %v2228 = vld [vmem:[#allocation7 + $0x1c] sm:$0xf]
    %v2229 = vld [vmem:[#allocation7 + $0x20] sm:$0xf]
    %v2230 = vld [vmem:[#allocation7 + $0x24] sm:$0xf]
    %v2231 = vld [vmem:[#allocation7 + $0x28] sm:$0xf]
    %v2232 = vld [vmem:[#allocation7 + $0x2c] sm:$0xf]
    %v2233 = vld [vmem:[#allocation7 + $0x30] sm:$0xf]
    %v2234 = vld [vmem:[#allocation7 + $0x34] sm:$0xf]
    %v2235 = vld [vmem:[#allocation7 + $0x38] sm:$0xf]
    %v2236 = vld [vmem:[#allocation7 + $0x3c] sm:$0xf]
    %v2237 = vld [vmem:[%s9] sm:$0x1]
    %v2239 = vlaneseq
    %v2240 = vshrl.u32 %v2239, 7
    %v2241 = vsub.s32 0, %v2240
    %v2242 = vrot.slane %v2237, %v2241
    %v2260 = vunpack.c.l.b16 %v2221
    %v2261 = vunpack.c.l.b16 %v2222
    %v2262 = vunpack.c.l.b16 %v2223
    %v2263 = vunpack.c.l.b16 %v2224
    %v2264 = vunpack.c.l.b16 %v2225
    %v2265 = vunpack.c.l.b16 %v2226
    %v2266 = vunpack.c.l.b16 %v2227
    %v2267 = vunpack.c.l.b16 %v2228
    %v2268 = vunpack.c.l.b16 %v2229
    %v2269 = vunpack.c.l.b16 %v2230
    %v2270 = vunpack.c.l.b16 %v2231
    %v2271 = vunpack.c.l.b16 %v2232
    %v2272 = vunpack.c.l.b16 %v2233
    %v2273 = vunpack.c.l.b16 %v2234
    %v2274 = vunpack.c.l.b16 %v2235
    %v2275 = vunpack.c.l.b16 %v2236
    %v2276 = vpack.c.b16 %v2261, %v2260
    %v2277 = vpack.c.b16 %v2263, %v2262
    %v2278 = vpack.c.b16 %v2265, %v2264
    %v2279 = vpack.c.b16 %v2267, %v2266
    %v2280 = vpack.c.b16 %v2269, %v2268
    %v2281 = vpack.c.b16 %v2271, %v2270
    %v2282 = vpack.c.b16 %v2273, %v2272
    %v2283 = vpack.c.b16 %v2275, %v2274
    %2292 = vmatprep.subr.bf16.mxu0 0
    %2293 = vmatpush1.bf16.msra.mxu0 %v2283
    %2294 = vmatprep.subr.bf16.mxu0 0
    %2295 = vmatpush1.bf16.msra.mxu0 %v2282
    %2296 = vmatprep.subr.bf16.mxu0 0
    %2297 = vmatpush1.bf16.msra.mxu0 %v2281
    %2298 = vmatprep.subr.bf16.mxu0 0
    %2299 = vmatpush1.bf16.msra.mxu0 %v2280
    %2300 = vmatprep.subr.bf16.mxu0 0
    %2301 = vmatpush1.bf16.msra.mxu0 %v2279
    %2302 = vmatprep.subr.bf16.mxu0 0
    %2303 = vmatpush1.bf16.msra.mxu0 %v2278
    %2304 = vmatprep.subr.bf16.mxu0 0
    %2305 = vmatpush1.bf16.msra.mxu0 %v2277
    %2306 = vmatprep.subr.bf16.mxu0 0
    %2307 = vmatpush1.bf16.msra.mxu0 %v2276
    %2308 = vmatprep.subr.bf16.mxu0 0
    %2309 = vmatpush2.bf16.msra.mxu0 0
    %2310 = vmatprep.subr.bf16.mxu0 0
    %2311 = vmatpush2.bf16.msra.mxu0 0
    %2312 = vmatprep.subr.bf16.mxu0 0
    %2313 = vmatpush2.bf16.msra.mxu0 0
    %2314 = vmatprep.subr.bf16.mxu0 0
    %2315 = vmatpush2.bf16.msra.mxu0 0
    %2316 = vmatprep.subr.bf16.mxu0 0
    %2317 = vmatpush2.bf16.msra.mxu0 0
    %2318 = vmatprep.subr.bf16.mxu0 0
    %2319 = vmatpush2.bf16.msra.mxu0 0
    %2320 = vmatprep.subr.bf16.mxu0 0
    %2321 = vmatpush2.bf16.msra.mxu0 0
    %2322 = vmatprep.subr.bf16.mxu0 0
    %2323 = vmatpush2.bf16.msra.mxu0 0
    %2324 = vmatprep.mubr.bf16.mxu0 0
    %2325 = vmatmul.mubr.bf16.gmra.mxu0 %v2102
    %v2326 = vpop.f32.mrf.mxu0
    %v2327 = vadd.f32 %v2242, %v2326
    %v2328 = vpop.f32.mrf.mxu0
    %v2329 = vpop.f32.mrf.mxu0
    %v2330 = vpop.f32.mrf.mxu0
    %2331 = vdwg.mxu0
    %v2332 = vsel %vm1084, %v2327, -inf
    %2333 = vmax.xlane.f32.xlu0 %v2332
    %v2334 = vpop.xlane.xlu0 %2333
    %v2335 = vsub.f32 %v2327, %v2334
    %v2336 = vmul.f32 %v2335, 1.442695
    %v2337 = vpow.pop %v2336
    %v2338 = vsel %vm1084, %v2337, 0.0
    %2339 = vadd.xlane.f32.xlu0 %v2338
    %v2340 = vpop.xlane.xlu0 %2339
    %v2341 = vrcp.pop %v2340
    %v2342 = vmul.f32 %v2337, %v2341
    %2343 = vst [vmem:[#allocation11] sm:$0x3] %v2220
    %2344 = vst [vmem:[#allocation12] sm:$0x3] %v2342
    // Predicated region
    $region54: #{network_forward.1} parent=1 // pred_check
      _
    $region55: #{network_forward.1} parent=1 // pred_check_branch
      %2346 = sbr.rel (0) target = $region57
    $region56: #{network_forward.1} parent=1 // pred_region
      %s2348 = ssub.s32 32, 32
      %2349 = vsyncadd [#allocation4], %s2348
      %s2351 = sshll.u32 [#allocation8], 4
      %s2352 = int_to_ptr.vmem [resolvable:$true] %s2351
      %2354 = dma.vmem_to_hbm [thread:$0]  %s2352, 32, %s10, [#allocation4]
    $region57: #{network_forward.1} parent=1 // pred_fallthru
      _
    // Predicated region
    $region58: #{network_forward.1} parent=1 // pred_check
      _
    $region59: #{network_forward.1} parent=1 // pred_check_branch
      %2356 = sbr.rel (0) target = $region61
    $region60: #{network_forward.1} parent=1 // pred_region
      %s2358 = ssub.s32 32, 32
      %2359 = vsyncadd [#allocation10], %s2358
      %s2361 = sshll.u32 [#allocation9], 4
      %s2362 = int_to_ptr.vmem [resolvable:$true] %s2361
      %2364 = dma.vmem_to_hbm [thread:$0]  %s2362, 32, %s11, [#allocation10]
    $region61: #{network_forward.1} parent=1 // pred_fallthru
      _
    // Predicated region
    $region62: #{network_forward.1} parent=1 // pred_check
      _
    $region63: #{network_forward.1} parent=1 // pred_check_branch
      %2366 = sbr.rel (0) target = $region65
    $region64: #{network_forward.1} parent=1 // pred_region
      %s2368 = ssub.s32 32, 32
      %2369 = vsyncadd [#allocation10], %s2368
      %s2371 = sshll.u32 [#allocation11], 4
      %s2372 = int_to_ptr.vmem [resolvable:$true] %s2371
      %2374 = dma.vmem_to_hbm [thread:$0]  %s2372, 32, %s12, [#allocation10]
    $region65: #{network_forward.1} parent=1 // pred_fallthru
      _
    // Predicated region
    $region66: #{network_forward.1} parent=1 // pred_check
      _
    $region67: #{network_forward.1} parent=1 // pred_check_branch
      %2376 = sbr.rel (0) target = $region69
    $region68: #{network_forward.1} parent=1 // pred_region
      %s2378 = ssub.s32 32, 32
      %2379 = vsyncadd [#allocation13], %s2378
      %s2381 = sshll.u32 [#allocation12], 4
      %s2382 = int_to_ptr.vmem [resolvable:$true] %s2381
      %2384 = dma.vmem_to_hbm [thread:$0]  %s2382, 32, %s13, [#allocation13]
    $region69: #{network_forward.1} parent=1 // pred_fallthru
      _
    // Predicated region
    $region70: #{network_forward.1} parent=1 // pred_check
      _
    $region71: #{network_forward.1} parent=1 // pred_check_branch
      %2386 = sbr.rel (0) target = $region73
    $region72: #{network_forward.1} parent=1 // pred_region
      %2387 = dma.done [#allocation4], 32
    $region73: #{network_forward.1} parent=1 // pred_fallthru
      _
    // Predicated region
    $region74: #{network_forward.1} parent=1 // pred_check
      _
    $region75: #{network_forward.1} parent=1 // pred_check_branch
      %2389 = sbr.rel (0) target = $region77
    $region76: #{network_forward.1} parent=1 // pred_region
      %2390 = dma.done [#allocation10], 32
    $region77: #{network_forward.1} parent=1 // pred_fallthru
      _
    // Predicated region
    $region78: #{network_forward.1} parent=1 // pred_check
      _
    $region79: #{network_forward.1} parent=1 // pred_check_branch
      %2392 = sbr.rel (0) target = $region81
    $region80: #{network_forward.1} parent=1 // pred_region
      %2393 = dma.done [#allocation10], 32
    $region81: #{network_forward.1} parent=1 // pred_fallthru
      _
    // Predicated region
    $region82: #{network_forward.1} parent=1 // pred_check
      _
    $region83: #{network_forward.1} parent=1 // pred_check_branch
      %2395 = sbr.rel (0) target = $region85
    $region84: #{network_forward.1} parent=1 // pred_region
      %2396 = dma.done [#allocation13], 32
    $region85: #{network_forward.1} parent=1 // pred_fallthru
      _
    %2397 = vsyncpa [#allocation3], 1
    %2398 = vsyncpa [#allocation6], 1
    %2399 = vsyncpa [#allocation4], 1
    %2400 = vsyncpa [#allocation10], 1
    %2401 = vsyncpa [#allocation13], 1

</llo_original>
